<compile_context>
chip_gen: v7x
topology: tpu7x:2x2x1
jax: 0.10.0
libtpu: 0.0.40
codegen_flags: <defaults>
</compile_context>

<pallas_src>
import math
from functools import partial

import jax
import jax.numpy as jnp
from jax.experimental import pallas as pl
from jax.experimental.pallas import tpu as pltpu


def _mha_kernel(*refs, block_b, q_len, kv_len, heads, dk, dv, has_mask):
    if has_mask:
        (xq_ref, xkv_ref, mask_ref,
         wq_ref, bq_ref, wk_ref, bk_ref, wv_ref, bv_ref, wp_ref, bp_ref,
         o_ref) = refs
    else:
        (xq_ref, xkv_ref,
         wq_ref, bq_ref, wk_ref, bk_ref, wv_ref, bv_ref, wp_ref, bp_ref,
         o_ref) = refs
        mask_ref = None

    rows_q = block_b * q_len
    out_pad = o_ref.shape[-1]

    xq = xq_ref[...]        # (block_b*Lq,  q_dim)  bf16, pre-flattened on host
    xkv = xkv_ref[...]      # (block_b*Lkv, kv_dim) bf16

    # Fused Q/K/V projections over ALL heads (one MXU matmul each).
    # The 1/sqrt(dk) scale is already folded into wq/bq on the host.
    q = jnp.dot(xq, wq_ref[...], preferred_element_type=jnp.float32) + bq_ref[...]
    k = jnp.dot(xkv, wk_ref[...], preferred_element_type=jnp.float32) + bk_ref[...]
    v = jnp.dot(xkv, wv_ref[...], preferred_element_type=jnp.float32) + bv_ref[...]
    q = q.astype(jnp.bfloat16)
    k = k.astype(jnp.bfloat16)
    v = v.astype(jnp.bfloat16)

    if has_mask:
        # int8 compared directly against 0 (no widening); hoisted out of the
        # per-head loop.
        masked = mask_ref[...] == 0            # (block_b, Lq, Lkv) bool

    # All heads in one grid step (static unroll): no per-head grid overhead,
    # no accumulator scratch, weights fetched once.
    acc = jnp.zeros((rows_q, out_pad), jnp.float32)
    for h in range(heads):
        qh = q[:, h * dk:(h + 1) * dk].reshape(block_b, q_len, dk)
        kh = k[:, h * dk:(h + 1) * dk].reshape(block_b, kv_len, dk)
        vh = v[:, h * dv:(h + 1) * dv].reshape(block_b, kv_len, dv)

        # scores: (block_b, Lq, Lkv)
        e = jnp.einsum("bqd,bkd->bqk", qh, kh,
                       preferred_element_type=jnp.float32)
        if has_mask:
            e = jnp.where(masked, jnp.float32(-1e20), e)

        # Numerically stable softmax in f32 on the VPU; denominator on the EUP.
        e = e - jnp.max(e, axis=-1, keepdims=True)
        p = jnp.exp(e)
        attn = p * pl.reciprocal(jnp.sum(p, axis=-1, keepdims=True), approx=True)

        # dropout(p=0.0) / eval mode is an identity -- skipped.
        ho = jnp.einsum("bqk,bkd->bqd", attn.astype(jnp.bfloat16), vh,
                        preferred_element_type=jnp.float32)      # (bb, Lq, dv)

        # This head's slab of the (zero-padded, lane-dense) output projection.
        acc = acc + jnp.dot(
            ho.reshape(rows_q, dv).astype(jnp.bfloat16),
            wp_ref[h * dv:(h + 1) * dv, :],
            preferred_element_type=jnp.float32)

    # Unmasked, lane-dense (out_pad % 128 == 0) store; wrapper slices back.
    o_ref[...] = (acc + bp_ref[...]).astype(o_ref.dtype)


def _pick_block_b(B, q_len, per_b_bytes, budget_bytes=32 * 1024 * 1024):
    """Largest divisor of B whose per-step working set fits the budget.

    Prefers block_b*Lq aligned to 128 (MXU M fill) and keeps >= 2 batch tiles
    when B >= 2 so v7x's two TensorCores both receive work.
    """
    divisors = [d for d in range(1, B + 1) if B % d == 0]
    fitting = [d for d in divisors if d * per_b_bytes <= budget_bytes] or [1]
    if B >= 2:
        two_tiles = [d for d in fitting if B // d >= 2]
        if two_tiles:
            fitting = two_tiles
    aligned = [d for d in fitting if (d * q_len) % 128 == 0]
    return max(aligned) if aligned else max(fitting)


def multi_head_attention(x_q, x_kv, params, heads, attention_mask=None):
    """Pallas implementation of MultiHeadAttention.forward.

    x_q:  (B, Lq, q_dim)   float32
    x_kv: (B, Lkv, kv_dim) float32
    attention_mask: optional, broadcastable to (B, Lq, Lkv); zero = masked.
    """
    B, Lq, q_dim = x_q.shape
    _, Lkv, kv_dim = x_kv.shape

    wq, bq = params["wq"], params["bq"]
    wk, bk = params["wk"], params["bk"]
    wv, bv = params["wv"], params["bv"]
    wp, bp = params["wp"], params["bp"]

    qk_out_dim = wq.shape[0]
    v_out_dim = wv.shape[0]
    output_dim = wp.shape[0]
    dk = qk_out_dim // heads
    dv = v_out_dim // heads
    scale = 1.0 / math.sqrt(dk)
    cdt = jnp.bfloat16

    # Zero-pad the output projection to a lane-dense width (>=128, %128 == 0)
    # so the kernel's output stores are never masked partial stores.
    out_pad = ((output_dim + 127) // 128) * 128

    # Host-side layout work (once per call): transpose to (in, out), fold the
    # softmax scale into Wq/bq, pad Wp/bp columns.
    wq2 = (wq.T * scale).astype(cdt)                                # (q_dim, H*dk)
    bq2 = (bq * scale).reshape(1, qk_out_dim).astype(jnp.float32)
    wk2 = wk.T.astype(cdt)                                          # (kv_dim, H*dk)
    bk2 = bk.reshape(1, qk_out_dim).astype(jnp.float32)
    wv2 = wv.T.astype(cdt)                                          # (kv_dim, H*dv)
    bv2 = bv.reshape(1, v_out_dim).astype(jnp.float32)
    wp2 = jnp.pad(wp.T.astype(cdt), ((0, 0), (0, out_pad - output_dim)))
    bp2 = jnp.pad(bp.astype(jnp.float32),
                  (0, out_pad - output_dim)).reshape(1, out_pad)

    # Pre-flatten activations on the host (block on rows) so there is no
    # (bb, L, dim) -> (bb*L, dim) relayout inside the kernel.
    xq2 = x_q.reshape(B * Lq, q_dim).astype(cdt)
    xkv2 = x_kv.reshape(B * Lkv, kv_dim).astype(cdt)

    has_mask = attention_mask is not None

    # Per-batch-element VMEM bytes: double-buffered tiles + f32 intermediates.
    per_b = (2 * 2 * (Lq * q_dim + Lkv * kv_dim)
             + (2 * Lq * Lkv if has_mask else 0)
             + 2 * 4 * Lq * out_pad
             + 4 * (Lq * qk_out_dim + Lkv * (qk_out_dim + v_out_dim)
                    + 3 * Lq * Lkv + Lq * out_pad))
    block_b = _pick_block_b(B, Lq, per_b)
    n_tiles = B // block_b
    rows_q, rows_kv = block_b * Lq, block_b * Lkv

    in_specs = [
        pl.BlockSpec((rows_q, q_dim), lambda b: (b, 0)),
        pl.BlockSpec((rows_kv, kv_dim), lambda b: (b, 0)),
    ]
    args = [xq2, xkv2]
    if has_mask:
        # TODO(synk): 4-D per-head masks (broadcast over the head axis in
        # torch) are not supported; only masks broadcastable to (B, Lq, Lkv).
        mask = jnp.broadcast_to(attention_mask, (B, Lq, Lkv))
        args.append((mask != 0).astype(jnp.int8))
        in_specs.append(pl.BlockSpec((block_b, Lq, Lkv), lambda b: (b, 0, 0)))

    # Weights/biases: whole-array blocks with a constant index map -> fetched
    # once, never re-DMA'd across batch tiles.
    def _full(arr):
        return pl.BlockSpec(arr.shape, lambda b: (0, 0))

    weight_args = [wq2, bq2, wk2, bk2, wv2, bv2, wp2, bp2]
    in_specs += [_full(a) for a in weight_args]
    args += weight_args

    # Scoped VMEM: generous working-set estimate, clamped to 75% of physical
    # VMEM (v7x = 64 MiB) and to <= 96 MiB (v5e/v6e = 128 MiB).
    weight_bytes = sum(int(a.size) * a.dtype.itemsize for a in weight_args)
    est = 2 * (2 * weight_bytes + block_b * per_b)
    try:
        vmem_cap = int(pltpu.get_tpu_info().vmem_capacity_bytes)
    except Exception:  # pragma: no cover - hardware query unavailable
        vmem_cap = 128 * 1024 * 1024
    vmem_limit = int(min(96 * 1024 * 1024, (3 * vmem_cap) // 4,
                         max(32 * 1024 * 1024, est)))

    flops = 2 * B * (Lq * q_dim * qk_out_dim
                     + Lkv * kv_dim * (qk_out_dim + v_out_dim)
                     + heads * Lq * Lkv * (dk + dv)
                     + Lq * v_out_dim * out_pad)
    bytes_accessed = (int(xq2.size) * 2 + int(xkv2.size) * 2 + weight_bytes
                      + (B * Lq * Lkv if has_mask else 0)
                      + B * Lq * out_pad * x_q.dtype.itemsize)
    cost = pl.CostEstimate(flops=flops,
                           transcendentals=B * heads * Lq * Lkv,
                           bytes_accessed=bytes_accessed)

    kernel = partial(_mha_kernel, block_b=block_b, q_len=Lq, kv_len=Lkv,
                     heads=heads, dk=dk, dv=dv, has_mask=has_mask)

    out = pl.pallas_call(
        kernel,
        out_shape=jax.ShapeDtypeStruct((B * Lq, out_pad), x_q.dtype),
        grid=(n_tiles,),
        in_specs=in_specs,
        out_specs=pl.BlockSpec((rows_q, out_pad), lambda b: (b, 0)),
        compiler_params=pltpu.CompilerParams(
            dimension_semantics=("parallel",),
            vmem_limit_bytes=vmem_limit),
        cost_estimate=cost,
    )(*args)

    # Slice away the lane padding and restore (B, Lq, output_dim).
    return out[:, :output_dim].reshape(B, Lq, output_dim)


def multi_head_attention_ref(x_q, x_kv, params, heads, attention_mask=None):
    """Pure-JAX reference mirroring the PyTorch forward exactly (f32)."""
    B, Lq, _ = x_q.shape
    Lkv = x_kv.shape[1]
    q = x_q @ params["wq"].T + params["bq"]
    k = x_kv @ params["wk"].T + params["bk"]
    v = x_kv @ params["wv"].T + params["bv"]
    H = heads
    dk = params["wq"].shape[0] // H
    dv = params["wv"].shape[0] // H
    q = q.reshape(B, Lq, H, dk)
    k = k.reshape(B, Lkv, H, dk)
    v = v.reshape(B, Lkv, H, dv)
    energy = jnp.einsum("nqhd,nkhd->nhqk", q, k)
    if attention_mask is not None:
        m = jnp.broadcast_to(attention_mask, (B, Lq, Lkv))[:, None, :, :]
        energy = jnp.where(m == 0, jnp.float32(-1e20), energy)
    attn = jax.nn.softmax(energy / math.sqrt(dk), axis=3)
    out = jnp.einsum("nhql,nlhd->nqhd", attn, v).reshape(B, Lq, H * dv)
    return out @ params["wp"].T + params["bp"]


def init_params(key, q_dim, kv_dim, qk_out_dim, v_out_dim, output_dim):
    """Deterministic nn.Linear-shaped parameters (weight: (out, in), bias: (out,))."""
    ks = jax.random.split(key, 8)
    mk = lambda k, o, i: jax.random.normal(k, (o, i), jnp.float32) * 0.05
    mb = lambda k, o: jax.random.normal(k, (o,), jnp.float32) * 0.05
    return {
        "wq": mk(ks[0], qk_out_dim, q_dim), "bq": mb(ks[1], qk_out_dim),
        "wk": mk(ks[2], qk_out_dim, kv_dim), "bk": mb(ks[3], qk_out_dim),
        "wv": mk(ks[4], v_out_dim, kv_dim), "bv": mb(ks[5], v_out_dim),
        "wp": mk(ks[6], output_dim, v_out_dim), "bp": mb(ks[7], output_dim),
    }


if __name__ == "__main__":
    # Shapes consistent with the module's forward:
    # x_q: (batch=2, query_len=8, q_dim=32); x_kv: (batch=2, key_len=16, kv_dim=32)
    batch, q_len, kv_len = 2, 8, 16
    q_dim = kv_dim = 32
    qk_out_dim = v_out_dim = output_dim = 32
    heads = 4

    key = jax.random.PRNGKey(0)
    k_xq, k_xkv, k_p, k_m = jax.random.split(key, 4)
    x_q = jax.random.normal(k_xq, (batch, q_len, q_dim), jnp.float32)
    x_kv = jax.random.normal(k_xkv, (batch, kv_len, kv_dim), jnp.float32)
    params = init_params(k_p, q_dim, kv_dim, qk_out_dim, v_out_dim, output_dim)

    # Path 1: no mask (specialized kernel, no mask DMA).
    out = jax.block_until_ready(
        multi_head_attention(x_q, x_kv, params, heads, attention_mask=None))
    ref = multi_head_attention_ref(x_q, x_kv, params, heads, attention_mask=None)
    assert out.shape == (batch, q_len, output_dim)
    err = float(jnp.max(jnp.abs(out - ref)))
    # bf16 MXU operands + approx reciprocal -> relaxed tolerance vs f32 ref.
    assert jnp.allclose(out, ref, rtol=2e-2, atol=2e-2), f"no-mask max abs err {err}"

    # Path 2: with an int8 attention mask (zero = masked).
    mask = jax.random.bernoulli(k_m, 0.7, (batch, q_len, kv_len)).astype(jnp.float32)
    mask = mask.at[:, :, 0].set(1.0)  # every query attends to at least one key
    out_m = jax.block_until_ready(
        multi_head_attention(x_q, x_kv, params, heads, attention_mask=mask))
    ref_m = multi_head_attention_ref(x_q, x_kv, params, heads, attention_mask=mask)
    err_m = float(jnp.max(jnp.abs(out_m - ref_m)))
    assert jnp.allclose(out_m, ref_m, rtol=2e-2, atol=2e-2), f"masked max abs err {err_m}"

    print("KERNEL_OK")
</pallas_src>

<mosaic_0001>
module attributes {stable_mosaic.version = 11 : i64} {
  func.func @_mha_kernel(%arg0: i32, %arg1: memref<8x32xbf16, #tpu.memory_space<vmem>>, %arg2: memref<16x32xbf16, #tpu.memory_space<vmem>>, %arg3: memref<32x32xbf16, #tpu.memory_space<vmem>>, %arg4: memref<1x32xf32, #tpu.memory_space<vmem>>, %arg5: memref<32x32xbf16, #tpu.memory_space<vmem>>, %arg6: memref<1x32xf32, #tpu.memory_space<vmem>>, %arg7: memref<32x32xbf16, #tpu.memory_space<vmem>>, %arg8: memref<1x32xf32, #tpu.memory_space<vmem>>, %arg9: memref<32x128xbf16, #tpu.memory_space<vmem>>, %arg10: memref<1x128xf32, #tpu.memory_space<vmem>>, %arg11: memref<8x128xf32, #tpu.memory_space<vmem>>) attributes {dimension_semantics = [#tpu.dimension_semantics<parallel>], iteration_bounds = array<i64: 2>, scalar_prefetch = 0 : i64, scratch_operands = 0 : i64, tpu.core_type = #tpu.core_type<tc>, window_params = [{transform_indices = @transform_0, window_bounds = array<i64: 8, 32>}, {transform_indices = @transform_1, window_bounds = array<i64: 16, 32>}, {pipeline_mode = #tpu.pipeline_mode<synchronous>, transform_indices = @transform_2, window_bounds = array<i64: 32, 32>}, {pipeline_mode = #tpu.pipeline_mode<synchronous>, transform_indices = @transform_3, window_bounds = array<i64: 1, 32>}, {pipeline_mode = #tpu.pipeline_mode<synchronous>, transform_indices = @transform_4, window_bounds = array<i64: 32, 32>}, {pipeline_mode = #tpu.pipeline_mode<synchronous>, transform_indices = @transform_5, window_bounds = array<i64: 1, 32>}, {pipeline_mode = #tpu.pipeline_mode<synchronous>, transform_indices = @transform_6, window_bounds = array<i64: 32, 32>}, {pipeline_mode = #tpu.pipeline_mode<synchronous>, transform_indices = @transform_7, window_bounds = array<i64: 1, 32>}, {pipeline_mode = #tpu.pipeline_mode<synchronous>, transform_indices = @transform_8, window_bounds = array<i64: 32, 128>}, {pipeline_mode = #tpu.pipeline_mode<synchronous>, transform_indices = @transform_9, window_bounds = array<i64: 1, 128>}, {transform_indices = @transform_10, window_bounds = array<i64: 8, 128>}]} {
    %c0 = arith.constant 0 : index
    %c0_0 = arith.constant 0 : index
    %0 = vector.load %arg1[%c0, %c0_0] : memref<8x32xbf16, #tpu.memory_space<vmem>>, vector<8x32xbf16>
    %c0_1 = arith.constant 0 : index
    %c0_2 = arith.constant 0 : index
    %1 = vector.load %arg2[%c0_1, %c0_2] : memref<16x32xbf16, #tpu.memory_space<vmem>>, vector<16x32xbf16>
    %c0_3 = arith.constant 0 : index
    %c0_4 = arith.constant 0 : index
    %2 = vector.load %arg3[%c0_3, %c0_4] : memref<32x32xbf16, #tpu.memory_space<vmem>>, vector<32x32xbf16>
    %cst = arith.constant dense<0.000000e+00> : vector<8x32xf32>
    %3 = tpu.matmul %0, %2, %cst {dimension_numbers = #tpu.dot_dimension_numbers<[1], [0], [0], [1], [0, 0, 1, 1], [], []>} : vector<8x32xbf16>, vector<32x32xbf16>, vector<8x32xf32> -> vector<8x32xf32>
    %c0_5 = arith.constant 0 : index
    %c0_6 = arith.constant 0 : index
    %4 = vector.load %arg4[%c0_5, %c0_6] : memref<1x32xf32, #tpu.memory_space<vmem>>, vector<1x32xf32>
    %5 = vector.broadcast %4 : vector<1x32xf32> to vector<8x32xf32>
    %6 = arith.addf %3, %5 : vector<8x32xf32>
    %c0_7 = arith.constant 0 : index
    %c0_8 = arith.constant 0 : index
    %7 = vector.load %arg5[%c0_7, %c0_8] : memref<32x32xbf16, #tpu.memory_space<vmem>>, vector<32x32xbf16>
    %cst_9 = arith.constant dense<0.000000e+00> : vector<16x32xf32>
    %8 = tpu.matmul %1, %7, %cst_9 {dimension_numbers = #tpu.dot_dimension_numbers<[1], [0], [0], [1], [0, 0, 1, 1], [], []>} : vector<16x32xbf16>, vector<32x32xbf16>, vector<16x32xf32> -> vector<16x32xf32>
    %c0_10 = arith.constant 0 : index
    %c0_11 = arith.constant 0 : index
    %9 = vector.load %arg6[%c0_10, %c0_11] : memref<1x32xf32, #tpu.memory_space<vmem>>, vector<1x32xf32>
    %10 = vector.broadcast %9 : vector<1x32xf32> to vector<16x32xf32>
    %11 = arith.addf %8, %10 : vector<16x32xf32>
    %c0_12 = arith.constant 0 : index
    %c0_13 = arith.constant 0 : index
    %12 = vector.load %arg7[%c0_12, %c0_13] : memref<32x32xbf16, #tpu.memory_space<vmem>>, vector<32x32xbf16>
    %cst_14 = arith.constant dense<0.000000e+00> : vector<16x32xf32>
    %13 = tpu.matmul %1, %12, %cst_14 {dimension_numbers = #tpu.dot_dimension_numbers<[1], [0], [0], [1], [0, 0, 1, 1], [], []>} : vector<16x32xbf16>, vector<32x32xbf16>, vector<16x32xf32> -> vector<16x32xf32>
    %c0_15 = arith.constant 0 : index
    %c0_16 = arith.constant 0 : index
    %14 = vector.load %arg8[%c0_15, %c0_16] : memref<1x32xf32, #tpu.memory_space<vmem>>, vector<1x32xf32>
    %15 = vector.broadcast %14 : vector<1x32xf32> to vector<16x32xf32>
    %16 = arith.addf %13, %15 : vector<16x32xf32>
    %17 = arith.truncf %6 : vector<8x32xf32> to vector<8x32xbf16>
    %18 = arith.truncf %11 : vector<16x32xf32> to vector<16x32xbf16>
    %19 = arith.truncf %16 : vector<16x32xf32> to vector<16x32xbf16>
    %cst_17 = arith.constant 0.000000e+00 : f32
    %20 = vector.broadcast %cst_17 : f32 to vector<8x128xf32>
    %21 = vector.extract_strided_slice %17 {offsets = [0, 0], sizes = [8, 8], strides = [1, 1]} : vector<8x32xbf16> to vector<8x8xbf16>
    %22 = vector.shape_cast %21 : vector<8x8xbf16> to vector<1x8x8xbf16>
    %23 = vector.extract_strided_slice %18 {offsets = [0, 0], sizes = [16, 8], strides = [1, 1]} : vector<16x32xbf16> to vector<16x8xbf16>
    %24 = vector.shape_cast %23 : vector<16x8xbf16> to vector<1x16x8xbf16>
    %25 = vector.extract_strided_slice %19 {offsets = [0, 0], sizes = [16, 8], strides = [1, 1]} : vector<16x32xbf16> to vector<16x8xbf16>
    %26 = vector.shape_cast %25 : vector<16x8xbf16> to vector<1x16x8xbf16>
    "tpu.trace_start"() <{level = 10 : i32, message = "bqd,bkd->bqk"}> : () -> ()
    %cst_18 = arith.constant dense<0.000000e+00> : vector<1x8x16xf32>
    %27 = tpu.matmul %22, %24, %cst_18 {dimension_numbers = #tpu.dot_dimension_numbers<[2], [2], [1], [1], [0, 0, 0, 1, 1, 1], [0], [0]>} : vector<1x8x8xbf16>, vector<1x16x8xbf16>, vector<1x8x16xf32> -> vector<1x8x16xf32>
    "tpu.trace_stop"() : () -> ()
    %cst_19 = arith.constant dense<0xFF800000> : vector<1x8xf32>
    %28 = vector.multi_reduction <maximumf>, %27, %cst_19 [2] : vector<1x8x16xf32> to vector<1x8xf32>
    %29 = vector.shape_cast %28 : vector<1x8xf32> to vector<1x8x1xf32>
    %30 = vector.broadcast %29 : vector<1x8x1xf32> to vector<1x8x16xf32>
    %31 = arith.subf %27, %30 : vector<1x8x16xf32>
    %32 = math.exp %31 : vector<1x8x16xf32>
    %cst_20 = arith.constant dense<0.000000e+00> : vector<1x8xf32>
    %33 = vector.multi_reduction <add>, %32, %cst_20 [2] : vector<1x8x16xf32> to vector<1x8xf32>
    %34 = vector.shape_cast %33 : vector<1x8xf32> to vector<1x8x1xf32>
    %35 = tpu.reciprocal %34 {approx = true} : vector<1x8x1xf32> -> vector<1x8x1xf32>
    %36 = vector.broadcast %35 : vector<1x8x1xf32> to vector<1x8x16xf32>
    %37 = arith.mulf %32, %36 : vector<1x8x16xf32>
    %38 = arith.truncf %37 : vector<1x8x16xf32> to vector<1x8x16xbf16>
    "tpu.trace_start"() <{level = 10 : i32, message = "bqk,bkd->bqd"}> : () -> ()
    %cst_21 = arith.constant dense<0.000000e+00> : vector<1x8x8xf32>
    %39 = tpu.matmul %38, %26, %cst_21 {dimension_numbers = #tpu.dot_dimension_numbers<[2], [1], [1], [2], [0, 0, 0, 1, 1, 2], [0], [0]>} : vector<1x8x16xbf16>, vector<1x16x8xbf16>, vector<1x8x8xf32> -> vector<1x8x8xf32>
    "tpu.trace_stop"() : () -> ()
    %40 = vector.shape_cast %39 : vector<1x8x8xf32> to vector<8x8xf32>
    %41 = arith.truncf %40 : vector<8x8xf32> to vector<8x8xbf16>
    %c0_22 = arith.constant 0 : index
    %c0_23 = arith.constant 0 : index
    %42 = vector.load %arg9[%c0_22, %c0_23] : memref<32x128xbf16, #tpu.memory_space<vmem>>, vector<8x128xbf16>
    %cst_24 = arith.constant dense<0.000000e+00> : vector<8x128xf32>
    %43 = tpu.matmul %41, %42, %cst_24 {dimension_numbers = #tpu.dot_dimension_numbers<[1], [0], [0], [1], [0, 0, 1, 1], [], []>} : vector<8x8xbf16>, vector<8x128xbf16>, vector<8x128xf32> -> vector<8x128xf32>
    %44 = arith.addf %20, %43 : vector<8x128xf32>
    %45 = vector.extract_strided_slice %17 {offsets = [0, 8], sizes = [8, 8], strides = [1, 1]} : vector<8x32xbf16> to vector<8x8xbf16>
    %46 = vector.shape_cast %45 : vector<8x8xbf16> to vector<1x8x8xbf16>
    %47 = vector.extract_strided_slice %18 {offsets = [0, 8], sizes = [16, 8], strides = [1, 1]} : vector<16x32xbf16> to vector<16x8xbf16>
    %48 = vector.shape_cast %47 : vector<16x8xbf16> to vector<1x16x8xbf16>
    %49 = vector.extract_strided_slice %19 {offsets = [0, 8], sizes = [16, 8], strides = [1, 1]} : vector<16x32xbf16> to vector<16x8xbf16>
    %50 = vector.shape_cast %49 : vector<16x8xbf16> to vector<1x16x8xbf16>
    "tpu.trace_start"() <{level = 10 : i32, message = "bqd,bkd->bqk"}> : () -> ()
    %cst_25 = arith.constant dense<0.000000e+00> : vector<1x8x16xf32>
    %51 = tpu.matmul %46, %48, %cst_25 {dimension_numbers = #tpu.dot_dimension_numbers<[2], [2], [1], [1], [0, 0, 0, 1, 1, 1], [0], [0]>} : vector<1x8x8xbf16>, vector<1x16x8xbf16>, vector<1x8x16xf32> -> vector<1x8x16xf32>
    "tpu.trace_stop"() : () -> ()
    %cst_26 = arith.constant dense<0xFF800000> : vector<1x8xf32>
    %52 = vector.multi_reduction <maximumf>, %51, %cst_26 [2] : vector<1x8x16xf32> to vector<1x8xf32>
    %53 = vector.shape_cast %52 : vector<1x8xf32> to vector<1x8x1xf32>
    %54 = vector.broadcast %53 : vector<1x8x1xf32> to vector<1x8x16xf32>
    %55 = arith.subf %51, %54 : vector<1x8x16xf32>
    %56 = math.exp %55 : vector<1x8x16xf32>
    %cst_27 = arith.constant dense<0.000000e+00> : vector<1x8xf32>
    %57 = vector.multi_reduction <add>, %56, %cst_27 [2] : vector<1x8x16xf32> to vector<1x8xf32>
    %58 = vector.shape_cast %57 : vector<1x8xf32> to vector<1x8x1xf32>
    %59 = tpu.reciprocal %58 {approx = true} : vector<1x8x1xf32> -> vector<1x8x1xf32>
    %60 = vector.broadcast %59 : vector<1x8x1xf32> to vector<1x8x16xf32>
    %61 = arith.mulf %56, %60 : vector<1x8x16xf32>
    %62 = arith.truncf %61 : vector<1x8x16xf32> to vector<1x8x16xbf16>
    "tpu.trace_start"() <{level = 10 : i32, message = "bqk,bkd->bqd"}> : () -> ()
    %cst_28 = arith.constant dense<0.000000e+00> : vector<1x8x8xf32>
    %63 = tpu.matmul %62, %50, %cst_28 {dimension_numbers = #tpu.dot_dimension_numbers<[2], [1], [1], [2], [0, 0, 0, 1, 1, 2], [0], [0]>} : vector<1x8x16xbf16>, vector<1x16x8xbf16>, vector<1x8x8xf32> -> vector<1x8x8xf32>
    "tpu.trace_stop"() : () -> ()
    %64 = vector.shape_cast %63 : vector<1x8x8xf32> to vector<8x8xf32>
    %65 = arith.truncf %64 : vector<8x8xf32> to vector<8x8xbf16>
    %c8 = arith.constant 8 : index
    %c0_29 = arith.constant 0 : index
    %66 = vector.load %arg9[%c8, %c0_29] : memref<32x128xbf16, #tpu.memory_space<vmem>>, vector<8x128xbf16>
    %cst_30 = arith.constant dense<0.000000e+00> : vector<8x128xf32>
    %67 = tpu.matmul %65, %66, %cst_30 {dimension_numbers = #tpu.dot_dimension_numbers<[1], [0], [0], [1], [0, 0, 1, 1], [], []>} : vector<8x8xbf16>, vector<8x128xbf16>, vector<8x128xf32> -> vector<8x128xf32>
    %68 = arith.addf %44, %67 : vector<8x128xf32>
    %69 = vector.extract_strided_slice %17 {offsets = [0, 16], sizes = [8, 8], strides = [1, 1]} : vector<8x32xbf16> to vector<8x8xbf16>
    %70 = vector.shape_cast %69 : vector<8x8xbf16> to vector<1x8x8xbf16>
    %71 = vector.extract_strided_slice %18 {offsets = [0, 16], sizes = [16, 8], strides = [1, 1]} : vector<16x32xbf16> to vector<16x8xbf16>
    %72 = vector.shape_cast %71 : vector<16x8xbf16> to vector<1x16x8xbf16>
    %73 = vector.extract_strided_slice %19 {offsets = [0, 16], sizes = [16, 8], strides = [1, 1]} : vector<16x32xbf16> to vector<16x8xbf16>
    %74 = vector.shape_cast %73 : vector<16x8xbf16> to vector<1x16x8xbf16>
    "tpu.trace_start"() <{level = 10 : i32, message = "bqd,bkd->bqk"}> : () -> ()
    %cst_31 = arith.constant dense<0.000000e+00> : vector<1x8x16xf32>
    %75 = tpu.matmul %70, %72, %cst_31 {dimension_numbers = #tpu.dot_dimension_numbers<[2], [2], [1], [1], [0, 0, 0, 1, 1, 1], [0], [0]>} : vector<1x8x8xbf16>, vector<1x16x8xbf16>, vector<1x8x16xf32> -> vector<1x8x16xf32>
    "tpu.trace_stop"() : () -> ()
    %cst_32 = arith.constant dense<0xFF800000> : vector<1x8xf32>
    %76 = vector.multi_reduction <maximumf>, %75, %cst_32 [2] : vector<1x8x16xf32> to vector<1x8xf32>
    %77 = vector.shape_cast %76 : vector<1x8xf32> to vector<1x8x1xf32>
    %78 = vector.broadcast %77 : vector<1x8x1xf32> to vector<1x8x16xf32>
    %79 = arith.subf %75, %78 : vector<1x8x16xf32>
    %80 = math.exp %79 : vector<1x8x16xf32>
    %cst_33 = arith.constant dense<0.000000e+00> : vector<1x8xf32>
    %81 = vector.multi_reduction <add>, %80, %cst_33 [2] : vector<1x8x16xf32> to vector<1x8xf32>
    %82 = vector.shape_cast %81 : vector<1x8xf32> to vector<1x8x1xf32>
    %83 = tpu.reciprocal %82 {approx = true} : vector<1x8x1xf32> -> vector<1x8x1xf32>
    %84 = vector.broadcast %83 : vector<1x8x1xf32> to vector<1x8x16xf32>
    %85 = arith.mulf %80, %84 : vector<1x8x16xf32>
    %86 = arith.truncf %85 : vector<1x8x16xf32> to vector<1x8x16xbf16>
    "tpu.trace_start"() <{level = 10 : i32, message = "bqk,bkd->bqd"}> : () -> ()
    %cst_34 = arith.constant dense<0.000000e+00> : vector<1x8x8xf32>
    %87 = tpu.matmul %86, %74, %cst_34 {dimension_numbers = #tpu.dot_dimension_numbers<[2], [1], [1], [2], [0, 0, 0, 1, 1, 2], [0], [0]>} : vector<1x8x16xbf16>, vector<1x16x8xbf16>, vector<1x8x8xf32> -> vector<1x8x8xf32>
    "tpu.trace_stop"() : () -> ()
    %88 = vector.shape_cast %87 : vector<1x8x8xf32> to vector<8x8xf32>
    %89 = arith.truncf %88 : vector<8x8xf32> to vector<8x8xbf16>
    %c16 = arith.constant 16 : index
    %c0_35 = arith.constant 0 : index
    %90 = vector.load %arg9[%c16, %c0_35] : memref<32x128xbf16, #tpu.memory_space<vmem>>, vector<8x128xbf16>
    %cst_36 = arith.constant dense<0.000000e+00> : vector<8x128xf32>
    %91 = tpu.matmul %89, %90, %cst_36 {dimension_numbers = #tpu.dot_dimension_numbers<[1], [0], [0], [1], [0, 0, 1, 1], [], []>} : vector<8x8xbf16>, vector<8x128xbf16>, vector<8x128xf32> -> vector<8x128xf32>
    %92 = arith.addf %68, %91 : vector<8x128xf32>
    %93 = vector.extract_strided_slice %17 {offsets = [0, 24], sizes = [8, 8], strides = [1, 1]} : vector<8x32xbf16> to vector<8x8xbf16>
    %94 = vector.shape_cast %93 : vector<8x8xbf16> to vector<1x8x8xbf16>
    %95 = vector.extract_strided_slice %18 {offsets = [0, 24], sizes = [16, 8], strides = [1, 1]} : vector<16x32xbf16> to vector<16x8xbf16>
    %96 = vector.shape_cast %95 : vector<16x8xbf16> to vector<1x16x8xbf16>
    %97 = vector.extract_strided_slice %19 {offsets = [0, 24], sizes = [16, 8], strides = [1, 1]} : vector<16x32xbf16> to vector<16x8xbf16>
    %98 = vector.shape_cast %97 : vector<16x8xbf16> to vector<1x16x8xbf16>
    "tpu.trace_start"() <{level = 10 : i32, message = "bqd,bkd->bqk"}> : () -> ()
    %cst_37 = arith.constant dense<0.000000e+00> : vector<1x8x16xf32>
    %99 = tpu.matmul %94, %96, %cst_37 {dimension_numbers = #tpu.dot_dimension_numbers<[2], [2], [1], [1], [0, 0, 0, 1, 1, 1], [0], [0]>} : vector<1x8x8xbf16>, vector<1x16x8xbf16>, vector<1x8x16xf32> -> vector<1x8x16xf32>
    "tpu.trace_stop"() : () -> ()
    %cst_38 = arith.constant dense<0xFF800000> : vector<1x8xf32>
    %100 = vector.multi_reduction <maximumf>, %99, %cst_38 [2] : vector<1x8x16xf32> to vector<1x8xf32>
    %101 = vector.shape_cast %100 : vector<1x8xf32> to vector<1x8x1xf32>
    %102 = vector.broadcast %101 : vector<1x8x1xf32> to vector<1x8x16xf32>
    %103 = arith.subf %99, %102 : vector<1x8x16xf32>
    %104 = math.exp %103 : vector<1x8x16xf32>
    %cst_39 = arith.constant dense<0.000000e+00> : vector<1x8xf32>
    %105 = vector.multi_reduction <add>, %104, %cst_39 [2] : vector<1x8x16xf32> to vector<1x8xf32>
    %106 = vector.shape_cast %105 : vector<1x8xf32> to vector<1x8x1xf32>
    %107 = tpu.reciprocal %106 {approx = true} : vector<1x8x1xf32> -> vector<1x8x1xf32>
    %108 = vector.broadcast %107 : vector<1x8x1xf32> to vector<1x8x16xf32>
    %109 = arith.mulf %104, %108 : vector<1x8x16xf32>
    %110 = arith.truncf %109 : vector<1x8x16xf32> to vector<1x8x16xbf16>
    "tpu.trace_start"() <{level = 10 : i32, message = "bqk,bkd->bqd"}> : () -> ()
    %cst_40 = arith.constant dense<0.000000e+00> : vector<1x8x8xf32>
    %111 = tpu.matmul %110, %98, %cst_40 {dimension_numbers = #tpu.dot_dimension_numbers<[2], [1], [1], [2], [0, 0, 0, 1, 1, 2], [0], [0]>} : vector<1x8x16xbf16>, vector<1x16x8xbf16>, vector<1x8x8xf32> -> vector<1x8x8xf32>
    "tpu.trace_stop"() : () -> ()
    %112 = vector.shape_cast %111 : vector<1x8x8xf32> to vector<8x8xf32>
    %113 = arith.truncf %112 : vector<8x8xf32> to vector<8x8xbf16>
    %c24 = arith.constant 24 : index
    %c0_41 = arith.constant 0 : index
    %114 = vector.load %arg9[%c24, %c0_41] : memref<32x128xbf16, #tpu.memory_space<vmem>>, vector<8x128xbf16>
    %cst_42 = arith.constant dense<0.000000e+00> : vector<8x128xf32>
    %115 = tpu.matmul %113, %114, %cst_42 {dimension_numbers = #tpu.dot_dimension_numbers<[1], [0], [0], [1], [0, 0, 1, 1], [], []>} : vector<8x8xbf16>, vector<8x128xbf16>, vector<8x128xf32> -> vector<8x128xf32>
    %116 = arith.addf %92, %115 : vector<8x128xf32>
    %c0_43 = arith.constant 0 : index
    %c0_44 = arith.constant 0 : index
    %117 = vector.load %arg10[%c0_43, %c0_44] : memref<1x128xf32, #tpu.memory_space<vmem>>, vector<1x128xf32>
    %118 = vector.broadcast %117 : vector<1x128xf32> to vector<8x128xf32>
    %119 = arith.addf %116, %118 : vector<8x128xf32>
    %c0_45 = arith.constant 0 : index
    %c0_46 = arith.constant 0 : index
    %120 = vector.load %arg11[%c0_45, %c0_46] : memref<8x128xf32, #tpu.memory_space<vmem>>, vector<8x128xf32>
    tpu.vector_store %arg11[%c0_45, %c0_46], %119 {strides = array<i32>} : memref<8x128xf32, #tpu.memory_space<vmem>>, vector<8x128xf32>,
    return
  }
  func.func @transform_0(%arg0: i32) -> (i32, i32) {
    %c0_i32 = arith.constant 0 : i32
    %c0_i32_0 = arith.constant 0 : i32
    return %arg0, %c0_i32 : i32, i32
  }
  func.func @transform_1(%arg0: i32) -> (i32, i32) {
    %c0_i32 = arith.constant 0 : i32
    %c0_i32_0 = arith.constant 0 : i32
    return %arg0, %c0_i32 : i32, i32
  }
  func.func @transform_2(%arg0: i32) -> (i32, i32) {
    %c0_i32 = arith.constant 0 : i32
    %c0_i32_0 = arith.constant 0 : i32
    %c0_i32_1 = arith.constant 0 : i32
    return %c0_i32, %c0_i32_0 : i32, i32
  }
  func.func @transform_3(%arg0: i32) -> (i32, i32) {
    %c0_i32 = arith.constant 0 : i32
    %c0_i32_0 = arith.constant 0 : i32
    %c0_i32_1 = arith.constant 0 : i32
    return %c0_i32, %c0_i32_0 : i32, i32
  }
  func.func @transform_4(%arg0: i32) -> (i32, i32) {
    %c0_i32 = arith.constant 0 : i32
    %c0_i32_0 = arith.constant 0 : i32
    %c0_i32_1 = arith.constant 0 : i32
    return %c0_i32, %c0_i32_0 : i32, i32
  }
  func.func @transform_5(%arg0: i32) -> (i32, i32) {
    %c0_i32 = arith.constant 0 : i32
    %c0_i32_0 = arith.constant 0 : i32
    %c0_i32_1 = arith.constant 0 : i32
    return %c0_i32, %c0_i32_0 : i32, i32
  }
  func.func @transform_6(%arg0: i32) -> (i32, i32) {
    %c0_i32 = arith.constant 0 : i32
    %c0_i32_0 = arith.constant 0 : i32
    %c0_i32_1 = arith.constant 0 : i32
    return %c0_i32, %c0_i32_0 : i32, i32
  }
  func.func @transform_7(%arg0: i32) -> (i32, i32) {
    %c0_i32 = arith.constant 0 : i32
    %c0_i32_0 = arith.constant 0 : i32
    %c0_i32_1 = arith.constant 0 : i32
    return %c0_i32, %c0_i32_0 : i32, i32
  }
  func.func @transform_8(%arg0: i32) -> (i32, i32) {
    %c0_i32 = arith.constant 0 : i32
    %c0_i32_0 = arith.constant 0 : i32
    %c0_i32_1 = arith.constant 0 : i32
    return %c0_i32, %c0_i32_0 : i32, i32
  }
  func.func @transform_9(%arg0: i32) -> (i32, i32) {
    %c0_i32 = arith.constant 0 : i32
    %c0_i32_0 = arith.constant 0 : i32
    %c0_i32_1 = arith.constant 0 : i32
    return %c0_i32, %c0_i32_0 : i32, i32
  }
  func.func @transform_10(%arg0: i32) -> (i32, i32) {
    %c0_i32 = arith.constant 0 : i32
    %c0_i32_0 = arith.constant 0 : i32
    return %arg0, %c0_i32 : i32, i32
  }
}

</mosaic_0001>

<llo_original>
// kernel: tpu_custom_call.1
$region0: #{tpu_custom_call.1}
  #allocation0 [shape = 'u32[]', space=smem, size = 0x4, offset = 0x4, fixed_abs, tag = 'smem constant byte address 0x4 - core index']
  #allocation1 [shape = 'u32[144,128]{1,0:T(1,128)}', space=vmem, size = 0x12000, scoped, tag = 'internal scratch']
  %s0 = inlined_call_operand.hbm [shape: bf16[16,32], index: 0, kind: input, shape index: {}]
  %s1 = inlined_call_operand.hbm [shape: bf16[32,32], index: 1, kind: input, shape index: {}]
  %s2 = inlined_call_operand.hbm [shape: bf16[32,32], index: 2, kind: input, shape index: {}]
  %s3 = inlined_call_operand.vmem [shape: f32[1,32], index: 3, kind: input, shape index: {}]
  %s4 = inlined_call_operand.hbm [shape: bf16[32,32], index: 4, kind: input, shape index: {}]
  %s5 = inlined_call_operand.vmem [shape: f32[1,32], index: 5, kind: input, shape index: {}]
  %s6 = inlined_call_operand.vmem [shape: bf16[32,32], index: 6, kind: input, shape index: {}]
  %s7 = inlined_call_operand.vmem [shape: f32[1,32], index: 7, kind: input, shape index: {}]
  %s8 = inlined_call_operand.hbm [shape: bf16[32,128], index: 8, kind: input, shape index: {}]
  %s9 = inlined_call_operand.vmem [shape: f32[1,128], index: 9, kind: input, shape index: {}]
  %s10 = inlined_call_operand.hbm [shape: f32[16,128], index: 10, kind: output, shape index: {}]
  %s11 = sld [smem:[#allocation0]]
  $region93: #{tpu_custom_call.1} parent=0
    _
  %s13 = ssub.s32 1, %s11
  %s14 = scalar_select 0, %s13, %s11
  $region1: #{tpu_custom_call.1} parent=0
    #allocation2 [shape = 'u8[4096]{0}', space=vmem, size = 0x1000, scoped, tag = 'input window, operand 0']
    #allocation3 [shape = 's32[2]{0}', space=sflag, size = 0x8, scoped, tag = 'scoped memory for tpu_custom_call.1']
    #allocation4 [shape = 's32[2]{0}', space=sflag, size = 0x8, scoped, tag = 'scoped memory for tpu_custom_call.1']
    #allocation5 [shape = 'u8[8192]{0}', space=vmem, size = 0x2000, scoped, tag = 'input window, operand 1']
    #allocation6 [shape = 's32[2]{0}', space=sflag, size = 0x8, scoped, tag = 'scoped memory for tpu_custom_call.1']
    #allocation7 [shape = 'u8[8192]{0}', space=vmem, size = 0x2000, scoped, tag = 'input window, operand 2, single buffered']
    #allocation8 [shape = 'u8[8192]{0}', space=vmem, size = 0x2000, scoped, tag = 'input window, operand 4, single buffered']
    #allocation9 [shape = 's32[1]{0}', space=sflag, size = 0x4, scoped, tag = 'scoped memory for tpu_custom_call.1']
    #allocation10 [shape = 'u8[8192]{0}', space=vmem, size = 0x2000, scoped, tag = 'input window, operand 8, single buffered']
    #allocation11 [shape = 'u8[8192]{0}', space=vmem, size = 0x2000, scoped, tag = 'output window, operand 0']
    %15 = vsyncpa [#allocation3], 0
    %s16 = scalar_lea.sflag [#allocation3], 1
    %17 = vsyncpa %s16, 0
    %18 = vsyncpa [#allocation6], 0
    %s19 = scalar_lea.sflag [#allocation6], 1
    %20 = vsyncpa %s19, 0
    %21 = vsyncpa [#allocation9], 0
    %22 = vsyncpa [#allocation4], 0
    %s23 = scalar_lea.sflag [#allocation4], 1
    %24 = vsyncpa %s23, 0
    loop: start=0, step=1, limit=4
    $region2: #{tpu_custom_call.1} parent=1 // loop_pre_header
      _
    $region3: #{tpu_custom_call.1} parent=1 // loop_header
      %s26 = sphi 0, %s30
      %p27 = scmp.ge.s32.totalorder %s26, 4
      %s36 = sphi 0, %s38
      %s39 = sphi 0, %s36
      %s40 = sphi 0, %s39
      %s56 = sphi 0, %s40
      %s62 = sphi 0, %s64
      %s65 = sphi 0, %s62
      %s66 = sphi 0, %s65
      %s82 = sphi 0, %s66
      %s86 = sphi 0, %s86
      %s88 = sphi 0, %s86
      %s89 = sphi 0, %s88
      %s103 = sphi 0, %s89
      %s107 = sphi 0, %s107
      %s109 = sphi 0, %s107
      %s110 = sphi 0, %s109
      %s124 = sphi 0, %s110
      %s128 = sphi 0, %s128
      %s130 = sphi 0, %s128
      %s131 = sphi 0, %s130
      %s145 = sphi 0, %s131
      %s149 = sphi 0, %s149
      %s151 = sphi 0, %s149
      %s152 = sphi 0, %s151
      %s166 = sphi 0, %s152
      %s170 = sphi 0, %s170
      %s172 = sphi 0, %s170
      %s173 = sphi 0, %s172
      %s187 = sphi 0, %s173
      %s191 = sphi 0, %s191
      %s193 = sphi 0, %s191
      %s194 = sphi 0, %s193
      %s208 = sphi 0, %s194
      %s212 = sphi 0, %s212
      %s214 = sphi 0, %s212
      %s215 = sphi 0, %s214
      %s229 = sphi 0, %s215
      %s233 = sphi 0, %s233
      %s235 = sphi 0, %s233
      %s236 = sphi 0, %s235
      %s250 = sphi 0, %s236
      %s256 = sphi 0, %s258
      %s259 = sphi 0, %s256
      %s260 = sphi 0, %s259
      %s276 = sphi 0, %s260
    $region4: #{tpu_custom_call.1} parent=1 // loop_header_branch
      %29 = sbr.rel (%p27) target = $region8
    $region5: #{tpu_custom_call.1} parent=1 // loop_body
      %s31 = ssub.s32 %s26, 1
      %s32 = ssub.s32 %s26, 2
      %s33 = sadd.s32 %s26, 1
      %s34 = ssub.s32 %s26, %s33
      %p35 = scmp.eq.s32.totalorder %s34, 0
      %s37 = sadd.s32 %s36, 1
      %s38 = scalar_select %p35, %s36, %s37
      %p41 = pneg %p35
      %p42 = scmp.eq.s32.totalorder %s26, 1
      %p43 = por %p41, %p42
      %p44 = scmp.ne.s32.totalorder %s36, %s39
      %p45 = scmp.eq.s32.totalorder %s26, 0
      %p46 = por %p44, %p45
      %p47 = scmp.ne.s32.totalorder %s36, %s39
      %p48 = scmp.eq.s32.totalorder %s31, 1
      %p49 = por %p47, %p48
      %p50 = scmp.ne.s32.totalorder %s39, %s40
      %p51 = scmp.eq.s32.totalorder %s31, 0
      %p52 = por %p50, %p51
      %p53 = scmp.ne.s32.totalorder %s39, %s40
      %p54 = scmp.eq.s32.totalorder %s32, 1
      %p55 = por %p53, %p54
      %p57 = scmp.ne.s32.totalorder %s40, %s56
      %p58 = scmp.eq.s32.totalorder %s32, 0
      %p59 = por %p57, %p58
      %s60 = ssub.s32 %s26, %s33
      %p61 = scmp.eq.s32.totalorder %s60, 0
      %s63 = sadd.s32 %s62, 1
      %s64 = scalar_select %p61, %s62, %s63
      %p67 = pneg %p61
      %p68 = scmp.eq.s32.totalorder %s26, 1
      %p69 = por %p67, %p68
      %p70 = scmp.ne.s32.totalorder %s62, %s65
      %p71 = scmp.eq.s32.totalorder %s26, 0
      %p72 = por %p70, %p71
      %p73 = scmp.ne.s32.totalorder %s62, %s65
      %p74 = scmp.eq.s32.totalorder %s31, 1
      %p75 = por %p73, %p74
      %p76 = scmp.ne.s32.totalorder %s65, %s66
      %p77 = scmp.eq.s32.totalorder %s31, 0
      %p78 = por %p76, %p77
      %p79 = scmp.ne.s32.totalorder %s65, %s66
      %p80 = scmp.eq.s32.totalorder %s32, 1
      %p81 = por %p79, %p80
      %p83 = scmp.ne.s32.totalorder %s66, %s82
      %p84 = scmp.eq.s32.totalorder %s32, 0
      %p85 = por %p83, %p84
      %s87 = sadd.s32 %s86, 1
      %p90 = scmp.eq.s32.totalorder %s26, 1
      %p91 = scmp.ne.s32.totalorder %s86, %s88
      %p92 = scmp.eq.s32.totalorder %s26, 0
      %p93 = por %p91, %p92
      %p94 = scmp.ne.s32.totalorder %s86, %s88
      %p95 = scmp.eq.s32.totalorder %s31, 1
      %p96 = por %p94, %p95
      %p97 = scmp.ne.s32.totalorder %s88, %s89
      %p98 = scmp.eq.s32.totalorder %s31, 0
      %p99 = por %p97, %p98
      %p100 = scmp.ne.s32.totalorder %s88, %s89
      %p101 = scmp.eq.s32.totalorder %s32, 1
      %p102 = por %p100, %p101
      %p104 = scmp.ne.s32.totalorder %s89, %s103
      %p105 = scmp.eq.s32.totalorder %s32, 0
      %p106 = por %p104, %p105
      %s108 = sadd.s32 %s107, 1
      %p111 = scmp.eq.s32.totalorder %s26, 1
      %p112 = scmp.ne.s32.totalorder %s107, %s109
      %p113 = scmp.eq.s32.totalorder %s26, 0
      %p114 = por %p112, %p113
      %p115 = scmp.ne.s32.totalorder %s107, %s109
      %p116 = scmp.eq.s32.totalorder %s31, 1
      %p117 = por %p115, %p116
      %p118 = scmp.ne.s32.totalorder %s109, %s110
      %p119 = scmp.eq.s32.totalorder %s31, 0
      %p120 = por %p118, %p119
      %p121 = scmp.ne.s32.totalorder %s109, %s110
      %p122 = scmp.eq.s32.totalorder %s32, 1
      %p123 = por %p121, %p122
      %p125 = scmp.ne.s32.totalorder %s110, %s124
      %p126 = scmp.eq.s32.totalorder %s32, 0
      %p127 = por %p125, %p126
      %s129 = sadd.s32 %s128, 1
      %p132 = scmp.eq.s32.totalorder %s26, 1
      %p133 = scmp.ne.s32.totalorder %s128, %s130
      %p134 = scmp.eq.s32.totalorder %s26, 0
      %p135 = por %p133, %p134
      %p136 = scmp.ne.s32.totalorder %s128, %s130
      %p137 = scmp.eq.s32.totalorder %s31, 1
      %p138 = por %p136, %p137
      %p139 = scmp.ne.s32.totalorder %s130, %s131
      %p140 = scmp.eq.s32.totalorder %s31, 0
      %p141 = por %p139, %p140
      %p142 = scmp.ne.s32.totalorder %s130, %s131
      %p143 = scmp.eq.s32.totalorder %s32, 1
      %p144 = por %p142, %p143
      %p146 = scmp.ne.s32.totalorder %s131, %s145
      %p147 = scmp.eq.s32.totalorder %s32, 0
      %p148 = por %p146, %p147
      %s150 = sadd.s32 %s149, 1
      %p153 = scmp.eq.s32.totalorder %s26, 1
      %p154 = scmp.ne.s32.totalorder %s149, %s151
      %p155 = scmp.eq.s32.totalorder %s26, 0
      %p156 = por %p154, %p155
      %p157 = scmp.ne.s32.totalorder %s149, %s151
      %p158 = scmp.eq.s32.totalorder %s31, 1
      %p159 = por %p157, %p158
      %p160 = scmp.ne.s32.totalorder %s151, %s152
      %p161 = scmp.eq.s32.totalorder %s31, 0
      %p162 = por %p160, %p161
      %p163 = scmp.ne.s32.totalorder %s151, %s152
      %p164 = scmp.eq.s32.totalorder %s32, 1
      %p165 = por %p163, %p164
      %p167 = scmp.ne.s32.totalorder %s152, %s166
      %p168 = scmp.eq.s32.totalorder %s32, 0
      %p169 = por %p167, %p168
      %s171 = sadd.s32 %s170, 1
      %p174 = scmp.eq.s32.totalorder %s26, 1
      %p175 = scmp.ne.s32.totalorder %s170, %s172
      %p176 = scmp.eq.s32.totalorder %s26, 0
      %p177 = por %p175, %p176
      %p178 = scmp.ne.s32.totalorder %s170, %s172
      %p179 = scmp.eq.s32.totalorder %s31, 1
      %p180 = por %p178, %p179
      %p181 = scmp.ne.s32.totalorder %s172, %s173
      %p182 = scmp.eq.s32.totalorder %s31, 0
      %p183 = por %p181, %p182
      %p184 = scmp.ne.s32.totalorder %s172, %s173
      %p185 = scmp.eq.s32.totalorder %s32, 1
      %p186 = por %p184, %p185
      %p188 = scmp.ne.s32.totalorder %s173, %s187
      %p189 = scmp.eq.s32.totalorder %s32, 0
      %p190 = por %p188, %p189
      %s192 = sadd.s32 %s191, 1
      %p195 = scmp.eq.s32.totalorder %s26, 1
      %p196 = scmp.ne.s32.totalorder %s191, %s193
      %p197 = scmp.eq.s32.totalorder %s26, 0
      %p198 = por %p196, %p197
      %p199 = scmp.ne.s32.totalorder %s191, %s193
      %p200 = scmp.eq.s32.totalorder %s31, 1
      %p201 = por %p199, %p200
      %p202 = scmp.ne.s32.totalorder %s193, %s194
      %p203 = scmp.eq.s32.totalorder %s31, 0
      %p204 = por %p202, %p203
      %p205 = scmp.ne.s32.totalorder %s193, %s194
      %p206 = scmp.eq.s32.totalorder %s32, 1
      %p207 = por %p205, %p206
      %p209 = scmp.ne.s32.totalorder %s194, %s208
      %p210 = scmp.eq.s32.totalorder %s32, 0
      %p211 = por %p209, %p210
      %s213 = sadd.s32 %s212, 1
      %p216 = scmp.eq.s32.totalorder %s26, 1
      %p217 = scmp.ne.s32.totalorder %s212, %s214
      %p218 = scmp.eq.s32.totalorder %s26, 0
      %p219 = por %p217, %p218
      %p220 = scmp.ne.s32.totalorder %s212, %s214
      %p221 = scmp.eq.s32.totalorder %s31, 1
      %p222 = por %p220, %p221
      %p223 = scmp.ne.s32.totalorder %s214, %s215
      %p224 = scmp.eq.s32.totalorder %s31, 0
      %p225 = por %p223, %p224
      %p226 = scmp.ne.s32.totalorder %s214, %s215
      %p227 = scmp.eq.s32.totalorder %s32, 1
      %p228 = por %p226, %p227
      %p230 = scmp.ne.s32.totalorder %s215, %s229
      %p231 = scmp.eq.s32.totalorder %s32, 0
      %p232 = por %p230, %p231
      %s234 = sadd.s32 %s233, 1
      %p237 = scmp.eq.s32.totalorder %s26, 1
      %p238 = scmp.ne.s32.totalorder %s233, %s235
      %p239 = scmp.eq.s32.totalorder %s26, 0
      %p240 = por %p238, %p239
      %p241 = scmp.ne.s32.totalorder %s233, %s235
      %p242 = scmp.eq.s32.totalorder %s31, 1
      %p243 = por %p241, %p242
      %p244 = scmp.ne.s32.totalorder %s235, %s236
      %p245 = scmp.eq.s32.totalorder %s31, 0
      %p246 = por %p244, %p245
      %p247 = scmp.ne.s32.totalorder %s235, %s236
      %p248 = scmp.eq.s32.totalorder %s32, 1
      %p249 = por %p247, %p248
      %p251 = scmp.ne.s32.totalorder %s236, %s250
      %p252 = scmp.eq.s32.totalorder %s32, 0
      %p253 = por %p251, %p252
      %s254 = ssub.s32 %s26, %s33
      %p255 = scmp.eq.s32.totalorder %s254, 0
      %s257 = sadd.s32 %s256, 1
      %s258 = scalar_select %p255, %s256, %s257
      %p261 = pneg %p255
      %p262 = scmp.eq.s32.totalorder %s26, 1
      %p263 = por %p261, %p262
      %p264 = scmp.ne.s32.totalorder %s256, %s259
      %p265 = scmp.eq.s32.totalorder %s26, 0
      %p266 = por %p264, %p265
      %p267 = scmp.ne.s32.totalorder %s256, %s259
      %p268 = scmp.eq.s32.totalorder %s31, 1
      %p269 = por %p267, %p268
      %p270 = scmp.ne.s32.totalorder %s259, %s260
      %p271 = scmp.eq.s32.totalorder %s31, 0
      %p272 = por %p270, %p271
      %p273 = scmp.ne.s32.totalorder %s259, %s260
      %p274 = scmp.eq.s32.totalorder %s32, 1
      %p275 = por %p273, %p274
      %p277 = scmp.ne.s32.totalorder %s260, %s276
      %p278 = scmp.eq.s32.totalorder %s32, 0
      %p279 = por %p277, %p278
      %p280 = scmp.le.s32.totalorder 1, %s26
      %p281 = scmp.lt.s32.totalorder %s26, 3
      %p282 = pnand %p280, %p281
      %p283 = pneg %p282
      // Predicated region
      $region9: #{tpu_custom_call.1} parent=5 // pred_check
        _
      $region10: #{tpu_custom_call.1} parent=5 // pred_check_branch
        %285 = sbr.rel (%p282) target = $region12
      $region11: #{tpu_custom_call.1} parent=5 // pred_region
        %s286 = ssub.s32 %s26, 1
        // Predicated region
        $region13: #{tpu_custom_call.1} parent=11 // pred_check
          %p287 = pneg %p99
        $region14: #{tpu_custom_call.1} parent=11 // pred_check_branch
          %289 = sbr.rel (%p287) target = $region16
        $region15: #{tpu_custom_call.1} parent=11 // pred_region
          %s291 = ssub.s32 256, 256
          %292 = vsyncadd [#allocation6], %s291
          %s293 = sshll.u32 [#allocation7], 4
          %s294 = int_to_ptr.vmem [resolvable:$true] %s293
          %299 = dma.hbm_to_vmem [thread:$0]  %s2, 256, %s294, [#allocation6], 64, 64, 4
        $region16: #{tpu_custom_call.1} parent=11 // pred_fallthru
          _
        // Predicated region
        $region17: #{tpu_custom_call.1} parent=11 // pred_check
          %p300 = pneg %p120
        $region18: #{tpu_custom_call.1} parent=11 // pred_check_branch
          %302 = sbr.rel (%p300) target = $region20
        $region19: #{tpu_custom_call.1} parent=11 // pred_region
          _
        $region20: #{tpu_custom_call.1} parent=11 // pred_fallthru
          _
        // Predicated region
        $region21: #{tpu_custom_call.1} parent=11 // pred_check
          %p303 = pneg %p141
        $region22: #{tpu_custom_call.1} parent=11 // pred_check_branch
          %305 = sbr.rel (%p303) target = $region24
        $region23: #{tpu_custom_call.1} parent=11 // pred_region
          %s307 = ssub.s32 256, 256
          %308 = vsyncadd [#allocation9], %s307
          %s309 = sshll.u32 [#allocation8], 4
          %s310 = int_to_ptr.vmem [resolvable:$true] %s309
          %315 = dma.hbm_to_vmem [thread:$0]  %s4, 256, %s310, [#allocation9], 64, 64, 4
        $region24: #{tpu_custom_call.1} parent=11 // pred_fallthru
          _
        // Predicated region
        $region25: #{tpu_custom_call.1} parent=11 // pred_check
          %p316 = pneg %p162
        $region26: #{tpu_custom_call.1} parent=11 // pred_check_branch
          %318 = sbr.rel (%p316) target = $region28
        $region27: #{tpu_custom_call.1} parent=11 // pred_region
          _
        $region28: #{tpu_custom_call.1} parent=11 // pred_fallthru
          _
        // Predicated region
        $region29: #{tpu_custom_call.1} parent=11 // pred_check
          %p319 = pneg %p183
        $region30: #{tpu_custom_call.1} parent=11 // pred_check_branch
          %321 = sbr.rel (%p319) target = $region32
        $region31: #{tpu_custom_call.1} parent=11 // pred_region
          _
        $region32: #{tpu_custom_call.1} parent=11 // pred_fallthru
          _
        // Predicated region
        $region33: #{tpu_custom_call.1} parent=11 // pred_check
          %p322 = pneg %p204
        $region34: #{tpu_custom_call.1} parent=11 // pred_check_branch
          %324 = sbr.rel (%p322) target = $region36
        $region35: #{tpu_custom_call.1} parent=11 // pred_region
          _
        $region36: #{tpu_custom_call.1} parent=11 // pred_fallthru
          _
        // Predicated region
        $region37: #{tpu_custom_call.1} parent=11 // pred_check
          %p325 = pneg %p225
        $region38: #{tpu_custom_call.1} parent=11 // pred_check_branch
          %327 = sbr.rel (%p325) target = $region40
        $region39: #{tpu_custom_call.1} parent=11 // pred_region
          %s329 = ssub.s32 256, 256
          %330 = vsyncadd [#allocation9], %s329
          %s331 = sshll.u32 [#allocation10], 4
          %s332 = int_to_ptr.vmem [resolvable:$true] %s331
          %337 = dma.hbm_to_vmem [thread:$0]  %s8, 256, %s332, [#allocation9], 64, 64, 4
        $region40: #{tpu_custom_call.1} parent=11 // pred_fallthru
          _
        // Predicated region
        $region41: #{tpu_custom_call.1} parent=11 // pred_check
          %p338 = pneg %p246
        $region42: #{tpu_custom_call.1} parent=11 // pred_check_branch
          %340 = sbr.rel (%p338) target = $region44
        $region43: #{tpu_custom_call.1} parent=11 // pred_region
          _
        $region44: #{tpu_custom_call.1} parent=11 // pred_fallthru
          _
      $region12: #{tpu_custom_call.1} parent=5 // pred_fallthru
        _
      %p341 = scmp.lt.s32.totalorder %s26, 2
      // Predicated region
      $region45: #{tpu_custom_call.1} parent=5 // pred_check
        %p342 = pneg %p341
      $region46: #{tpu_custom_call.1} parent=5 // pred_check_branch
        %344 = sbr.rel (%p342) target = $region48
      $region47: #{tpu_custom_call.1} parent=5 // pred_region
        // Predicated region
        $region49: #{tpu_custom_call.1} parent=47 // pred_check
          %p345 = pneg %p46
        $region50: #{tpu_custom_call.1} parent=47 // pred_check_branch
          %347 = sbr.rel (%p345) target = $region52
        $region51: #{tpu_custom_call.1} parent=47 // pred_region
          %s348 = sand.u32 %s36, 1
          %s349 = scalar_lea.sflag [#allocation3], %s348
          %s350 = sand.u32 %s36, 1
          %s351 = smul.addr %s350, 4
          %s352 = scalar_lea.vmem [#allocation2], %s351
          %s354 = ssub.s32 64, 64
          %355 = vsyncadd %s349, %s354
          %s356 = smul.addr %s26, 64
          %s357 = scalar_lea.hbm %s0, %s356
          %s359 = sshll.u32 %s352, 4
          %s360 = int_to_ptr.vmem [resolvable:$true] %s359
          %362 = dma.hbm_to_vmem [thread:$0]  %s357, 64, %s360, %s349
        $region52: #{tpu_custom_call.1} parent=47 // pred_fallthru
          _
        // Predicated region
        $region53: #{tpu_custom_call.1} parent=47 // pred_check
          %p363 = pneg %p72
        $region54: #{tpu_custom_call.1} parent=47 // pred_check_branch
          %365 = sbr.rel (%p363) target = $region56
        $region55: #{tpu_custom_call.1} parent=47 // pred_region
          %s366 = sand.u32 %s26, 1
          %s367 = scalar_lea.sflag [#allocation6], %s366
          %s368 = sand.u32 %s62, 1
          %s369 = smul.addr %s368, 8
          %s370 = scalar_lea.vmem [#allocation5], %s369
          %s371 = smul.u32 2, %s26
          %s373 = ssub.s32 128, 128
          %374 = vsyncadd %s367, %s373
          %s375 = smul.addr %s371, 64
          %s376 = scalar_lea.hbm %s1, %s375
          %s377 = sshll.u32 %s370, 4
          %s378 = int_to_ptr.vmem [resolvable:$true] %s377
          %383 = dma.hbm_to_vmem [thread:$0]  %s376, 128, %s378, %s367, 64, 64, 4
        $region56: #{tpu_custom_call.1} parent=47 // pred_fallthru
          _
      $region48: #{tpu_custom_call.1} parent=5 // pred_fallthru
        _
      %p384 = scmp.le.s32.totalorder 1, %s26
      %p385 = scmp.lt.s32.totalorder %s26, 3
      %p386 = pnand %p384, %p385
      %p387 = pneg %p386
      // Predicated region
      $region57: #{tpu_custom_call.1} parent=5 // pred_check
        _
      $region58: #{tpu_custom_call.1} parent=5 // pred_check_branch
        %389 = sbr.rel (%p386) target = $region60
      $region59: #{tpu_custom_call.1} parent=5 // pred_region
        %s390 = ssub.s32 %s26, 1
        %s391 = sand.u32 %s39, 1
        %s392 = scalar_lea.sflag [#allocation3], %s391
        %s393 = sand.u32 %s39, 1
        %s394 = smul.addr %s393, 4
        %s395 = scalar_lea.vmem [#allocation2], %s394
        // Predicated region
        $region61: #{tpu_custom_call.1} parent=59 // pred_check
          %p396 = pneg %p52
        $region62: #{tpu_custom_call.1} parent=59 // pred_check_branch
          %398 = sbr.rel (%p396) target = $region64
        $region63: #{tpu_custom_call.1} parent=59 // pred_region
          %399 = dma.done %s392, 64
        $region64: #{tpu_custom_call.1} parent=59 // pred_fallthru
          _
        %s400 = sand.u32 %s31, 1
        %s401 = scalar_lea.sflag [#allocation6], %s400
        %s402 = sand.u32 %s65, 1
        %s403 = smul.addr %s402, 8
        %s404 = scalar_lea.vmem [#allocation5], %s403
        // Predicated region
        $region65: #{tpu_custom_call.1} parent=59 // pred_check
          %p405 = pneg %p78
        $region66: #{tpu_custom_call.1} parent=59 // pred_check_branch
          %407 = sbr.rel (%p405) target = $region68
        $region67: #{tpu_custom_call.1} parent=59 // pred_region
          %408 = dma.done %s401, 128
        $region68: #{tpu_custom_call.1} parent=59 // pred_fallthru
          _
        // Predicated region
        $region69: #{tpu_custom_call.1} parent=59 // pred_check
          %p409 = pneg %p99
        $region70: #{tpu_custom_call.1} parent=59 // pred_check_branch
          %411 = sbr.rel (%p409) target = $region72
        $region71: #{tpu_custom_call.1} parent=59 // pred_region
          %412 = dma.done [#allocation6], 256
        $region72: #{tpu_custom_call.1} parent=59 // pred_fallthru
          _
        // Predicated region
        $region73: #{tpu_custom_call.1} parent=59 // pred_check
          %p413 = pneg %p141
        $region74: #{tpu_custom_call.1} parent=59 // pred_check_branch
          %415 = sbr.rel (%p413) target = $region76
        $region75: #{tpu_custom_call.1} parent=59 // pred_region
          %416 = dma.done [#allocation9], 256
        $region76: #{tpu_custom_call.1} parent=59 // pred_fallthru
          _
        // Predicated region
        $region77: #{tpu_custom_call.1} parent=59 // pred_check
          %p417 = pneg %p225
        $region78: #{tpu_custom_call.1} parent=59 // pred_check_branch
          %419 = sbr.rel (%p417) target = $region80
        $region79: #{tpu_custom_call.1} parent=59 // pred_region
          %420 = dma.done [#allocation9], 256
        $region80: #{tpu_custom_call.1} parent=59 // pred_fallthru
          _
        %s421 = sand.u32 %s39, 1
        %s422 = scalar_lea.sflag [#allocation3], %s421
        %s423 = sand.u32 %s39, 1
        %s424 = smul.addr %s423, 4
        %s425 = scalar_lea.vmem [#allocation2], %s424
        %p426 = pneg %p52
        %p427 = pneg %p49
        %s428 = sand.u32 %s31, 1
        %s429 = scalar_lea.sflag [#allocation6], %s428
        %s430 = sand.u32 %s65, 1
        %s431 = smul.addr %s430, 8
        %s432 = scalar_lea.vmem [#allocation5], %s431
        %p433 = pneg %p78
        %p434 = pneg %p75
        %p435 = pneg %p99
        %p436 = pneg %p96
        %p437 = pneg %p120
        %p438 = pneg %p117
        %p439 = pneg %p141
        %p440 = pneg %p138
        %p441 = pneg %p162
        %p442 = pneg %p159
        %p443 = pneg %p183
        %p444 = pneg %p180
        %p445 = pneg %p204
        %p446 = pneg %p201
        %p447 = pneg %p225
        %p448 = pneg %p222
        %p449 = pneg %p246
        %p450 = pneg %p243
        %p451 = pneg %p272
        %p452 = pneg %p269
        %s453 = sand.u32 %s259, 1
        %s454 = scalar_lea.sflag [#allocation4], %s453
        %s455 = sand.u32 %s259, 1
        %s456 = smul.addr %s455, 8
        %s457 = scalar_lea.vmem [#allocation11], %s456
        %s458 = smul.u32 2, %s31
        %v460 = vld [vmem:[%s395] sm:$0xf]
        %v461 = vld [vmem:[%s404] sm:$0xf]
        %v462 = vld [vmem:[%s404 + $0x4] sm:$0xf]
        %v463 = vld [vmem:[#allocation7] sm:$0xf]
        %v464 = vld [vmem:[#allocation7 + $0x4] sm:$0xf]
        %v465 = vld [vmem:[#allocation7 + $0x8] sm:$0xf]
        %v466 = vld [vmem:[#allocation7 + $0xc] sm:$0xf]
        %v467 = vld [vmem:[%s3] sm:$0x1]
        %v469 = vlaneseq
        %v470 = vshrl.u32 %v469, 7
        %v471 = vsub.s32 0, %v470
        %v472 = vrot.slane %v467, %v471
        %v478 = vunpack.c.l.b16 %v463
        %v479 = vunpack.c.l.b16 %v464
        %v480 = vunpack.c.l.b16 %v465
        %v481 = vunpack.c.l.b16 %v466
        %v482 = vpack.c.b16 %v479, %v478
        %v483 = vpack.c.b16 %v481, %v480
        %vm486 = vcmask 261120
        %v488 = vsel %vm486, %v460, 0
        %490 = vmatprep.subr.bf16.mxu0 0
        %491 = vmatpush1.bf16.msra.mxu0 %v482
        %492 = vmatprep.subr.bf16.mxu0 0
        %493 = vmatpush1.bf16.msra.mxu0 %v483
        %494 = vmatprep.subr.bf16.mxu0 0
        %495 = vmatpush1.bf16.msra.mxu0 0
        %496 = vmatprep.subr.bf16.mxu0 0
        %497 = vmatpush1.bf16.msra.mxu0 0
        %498 = vmatprep.subr.bf16.mxu0 0
        %499 = vmatpush1.bf16.msra.mxu0 0
        %500 = vmatprep.subr.bf16.mxu0 0
        %501 = vmatpush1.bf16.msra.mxu0 0
        %502 = vmatprep.subr.bf16.mxu0 0
        %503 = vmatpush1.bf16.msra.mxu0 0
        %504 = vmatprep.subr.bf16.mxu0 0
        %505 = vmatpush1.bf16.msra.mxu0 0
        %506 = vmatprep.subr.bf16.mxu0 0
        %507 = vmatpush1.bf16.msra.mxu0 0
        %508 = vmatprep.subr.bf16.mxu0 0
        %509 = vmatpush1.bf16.msra.mxu0 0
        %510 = vmatprep.subr.bf16.mxu0 0
        %511 = vmatpush1.bf16.msra.mxu0 0
        %512 = vmatprep.subr.bf16.mxu0 0
        %513 = vmatpush1.bf16.msra.mxu0 0
        %514 = vmatprep.subr.bf16.mxu0 0
        %515 = vmatpush1.bf16.msra.mxu0 0
        %516 = vmatprep.subr.bf16.mxu0 0
        %517 = vmatpush1.bf16.msra.mxu0 0
        %518 = vmatprep.subr.bf16.mxu0 0
        %519 = vmatpush1.bf16.msra.mxu0 0
        %520 = vmatprep.subr.bf16.mxu0 0
        %521 = vmatpush1.bf16.msra.mxu0 0
        %522 = vmatprep.mubr.bf16.mxu0 0
        %523 = vmatmul.mubr.bf16.gmra.mrb[0].mxu0 %v488
        %v524 = vpop.f32.mrb[0].mxu0
        %v525 = vadd.f32 %v472, %v524
        %v526 = vpop.f32.mrb[0].mxu0
        %v527 = vpop.f32.mrb[0].mxu0
        %v528 = vpop.f32.mrb[0].mxu0
        %529 = vdwg.mxu0
        %v530 = vld [vmem:[#allocation8] sm:$0xf]
        %v531 = vld [vmem:[#allocation8 + $0x4] sm:$0xf]
        %v532 = vld [vmem:[#allocation8 + $0x8] sm:$0xf]
        %v533 = vld [vmem:[#allocation8 + $0xc] sm:$0xf]
        %v534 = vld [vmem:[%s5] sm:$0x1]
        %v536 = vlaneseq
        %v537 = vshrl.u32 %v536, 7
        %v538 = vsub.s32 0, %v537
        %v539 = vrot.slane %v534, %v538
        %v543 = vunpack.c.l.b16 %v461
        %v544 = vunpack.c.l.b16 %v462
        %v545 = vpack.c.b16 %v544, %v543
        %v550 = vunpack.c.l.b16 %v530
        %v551 = vunpack.c.l.b16 %v531
        %v552 = vunpack.c.l.b16 %v532
        %v553 = vunpack.c.l.b16 %v533
        %v554 = vpack.c.b16 %v551, %v550
        %v555 = vpack.c.b16 %v553, %v552
        %v559 = vsel %vm486, %v545, 0
        %561 = vmatprep.subr.bf16.mxu0 0
        %562 = vmatpush1.bf16.msra.mxu0 %v554
        %563 = vmatprep.subr.bf16.mxu0 0
        %564 = vmatpush1.bf16.msra.mxu0 %v555
        %565 = vmatprep.subr.bf16.mxu0 0
        %566 = vmatpush1.bf16.msra.mxu0 0
        %567 = vmatprep.subr.bf16.mxu0 0
        %568 = vmatpush1.bf16.msra.mxu0 0
        %569 = vmatprep.subr.bf16.mxu0 0
        %570 = vmatpush1.bf16.msra.mxu0 0
        %571 = vmatprep.subr.bf16.mxu0 0
        %572 = vmatpush1.bf16.msra.mxu0 0
        %573 = vmatprep.subr.bf16.mxu0 0
        %574 = vmatpush1.bf16.msra.mxu0 0
        %575 = vmatprep.subr.bf16.mxu0 0
        %576 = vmatpush1.bf16.msra.mxu0 0
        %577 = vmatprep.subr.bf16.mxu0 0
        %578 = vmatpush1.bf16.msra.mxu0 0
        %579 = vmatprep.subr.bf16.mxu0 0
        %580 = vmatpush1.bf16.msra.mxu0 0
        %581 = vmatprep.subr.bf16.mxu0 0
        %582 = vmatpush1.bf16.msra.mxu0 0
        %583 = vmatprep.subr.bf16.mxu0 0
        %584 = vmatpush1.bf16.msra.mxu0 0
        %585 = vmatprep.subr.bf16.mxu0 0
        %586 = vmatpush1.bf16.msra.mxu0 0
        %587 = vmatprep.subr.bf16.mxu0 0
        %588 = vmatpush1.bf16.msra.mxu0 0
        %589 = vmatprep.subr.bf16.mxu0 0
        %590 = vmatpush1.bf16.msra.mxu0 0
        %591 = vmatprep.subr.bf16.mxu0 0
        %592 = vmatpush1.bf16.msra.mxu0 0
        %593 = vmatprep.mubr.bf16.mxu0 0
        %594 = vmatmul.mubr.bf16.gmra.mrb[0].mxu0 %v559
        %v595 = vpop.f32.mrb[0].mxu0
        %v596 = vadd.f32 %v539, %v595
        %v597 = vpop.f32.mrb[0].mxu0
        %v598 = vpop.f32.mrb[0].mxu0
        %v599 = vadd.f32 %v539, %v598
        %v600 = vpop.f32.mrb[0].mxu0
        %601 = vdwg.mxu0
        %v602 = vld [vmem:[%s6] sm:$0xf]
        %v603 = vld [vmem:[%s6 + $0x4] sm:$0xf]
        %v604 = vld [vmem:[%s6 + $0x8] sm:$0xf]
        %v605 = vld [vmem:[%s6 + $0xc] sm:$0xf]
        %v606 = vld [vmem:[%s7] sm:$0x1]
        %v608 = vlaneseq
        %v609 = vshrl.u32 %v608, 7
        %v610 = vsub.s32 0, %v609
        %v611 = vrot.slane %v606, %v610
        %v617 = vunpack.c.l.b16 %v602
        %v618 = vunpack.c.l.b16 %v603
        %v619 = vunpack.c.l.b16 %v604
        %v620 = vunpack.c.l.b16 %v605
        %v621 = vpack.c.b16 %v618, %v617
        %v622 = vpack.c.b16 %v620, %v619
        %625 = vmatprep.subr.bf16.mxu0 0
        %626 = vmatpush1.bf16.msra.mxu0 %v621
        %627 = vmatprep.subr.bf16.mxu0 0
        %628 = vmatpush1.bf16.msra.mxu0 %v622
        %629 = vmatprep.subr.bf16.mxu0 0
        %630 = vmatpush1.bf16.msra.mxu0 0
        %631 = vmatprep.subr.bf16.mxu0 0
        %632 = vmatpush1.bf16.msra.mxu0 0
        %633 = vmatprep.subr.bf16.mxu0 0
        %634 = vmatpush1.bf16.msra.mxu0 0
        %635 = vmatprep.subr.bf16.mxu0 0
        %636 = vmatpush1.bf16.msra.mxu0 0
        %637 = vmatprep.subr.bf16.mxu0 0
        %638 = vmatpush1.bf16.msra.mxu0 0
        %639 = vmatprep.subr.bf16.mxu0 0
        %640 = vmatpush1.bf16.msra.mxu0 0
        %641 = vmatprep.subr.bf16.mxu0 0
        %642 = vmatpush1.bf16.msra.mxu0 0
        %643 = vmatprep.subr.bf16.mxu0 0
        %644 = vmatpush1.bf16.msra.mxu0 0
        %645 = vmatprep.subr.bf16.mxu0 0
        %646 = vmatpush1.bf16.msra.mxu0 0
        %647 = vmatprep.subr.bf16.mxu0 0
        %648 = vmatpush1.bf16.msra.mxu0 0
        %649 = vmatprep.subr.bf16.mxu0 0
        %650 = vmatpush1.bf16.msra.mxu0 0
        %651 = vmatprep.subr.bf16.mxu0 0
        %652 = vmatpush1.bf16.msra.mxu0 0
        %653 = vmatprep.subr.bf16.mxu0 0
        %654 = vmatpush1.bf16.msra.mxu0 0
        %655 = vmatprep.subr.bf16.mxu0 0
        %656 = vmatpush1.bf16.msra.mxu0 0
        %657 = vmatprep.mubr.bf16.mxu0 0
        %658 = vmatmul.mubr.bf16.gmra.mrb[0].mxu0 %v559
        %v659 = vpop.f32.mrb[0].mxu0
        %v660 = vadd.f32 %v611, %v659
        %v661 = vpop.f32.mrb[0].mxu0
        %v662 = vpop.f32.mrb[0].mxu0
        %v663 = vadd.f32 %v611, %v662
        %v664 = vpop.f32.mrb[0].mxu0
        %665 = vdwg.mxu0
        %v666 = vpack.c.bf16 %v525, %v525
        %v667 = vpack.c.bf16 %v599, %v596
        %v668 = vpack.c.bf16 %v663, %v660
        %vm669 = vcmask 64512
        %v671 = vsel %vm669, %v666, 0
        %v674 = vsel %vm669, %v667, 0
        %676 = vmatprep.subr.bf16.mxu0 0
        %677 = vmatpush1.bf16.xpose.msra.mxu0 %v674
        %678 = vmatprep.subr.bf16.mxu0 0
        %679 = vmatpush1.bf16.xpose.msra.mxu0 0
        %680 = vmatprep.subr.bf16.mxu0 0
        %681 = vmatpush1.bf16.xpose.msra.mxu0 0
        %682 = vmatprep.subr.bf16.mxu0 0
        %683 = vmatpush1.bf16.xpose.msra.mxu0 0
        %684 = vmatprep.subr.bf16.mxu0 0
        %685 = vmatpush1.bf16.xpose.msra.mxu0 0
        %686 = vmatprep.subr.bf16.mxu0 0
        %687 = vmatpush1.bf16.xpose.msra.mxu0 0
        %688 = vmatprep.subr.bf16.mxu0 0
        %689 = vmatpush1.bf16.xpose.msra.mxu0 0
        %690 = vmatprep.subr.bf16.mxu0 0
        %691 = vmatpush1.bf16.xpose.msra.mxu0 0
        %692 = vmatprep.subr.bf16.mxu0 0
        %693 = vmatpush1.bf16.xpose.msra.mxu0 0
        %694 = vmatprep.subr.bf16.mxu0 0
        %695 = vmatpush1.bf16.xpose.msra.mxu0 0
        %696 = vmatprep.subr.bf16.mxu0 0
        %697 = vmatpush1.bf16.xpose.msra.mxu0 0
        %698 = vmatprep.subr.bf16.mxu0 0
        %699 = vmatpush1.bf16.xpose.msra.mxu0 0
        %700 = vmatprep.subr.bf16.mxu0 0
        %701 = vmatpush1.bf16.xpose.msra.mxu0 0
        %702 = vmatprep.subr.bf16.mxu0 0
        %703 = vmatpush1.bf16.xpose.msra.mxu0 0
        %704 = vmatprep.subr.bf16.mxu0 0
        %705 = vmatpush1.bf16.xpose.msra.mxu0 0
        %706 = vmatprep.subr.bf16.mxu0 0
        %707 = vmatpush1.bf16.xpose.msra.mxu0 0
        %708 = vmatprep.mubr.bf16.mxu0 0
        %709 = vmatmul.mubr.bf16.gmra.mrb[0].mxu0 %v671
        %v710 = vpop.f32.mrb[0].mxu0
        %v711 = vadd.f32 0.0, %v710
        %v712 = vpop.f32.mrb[0].mxu0
        %v713 = vpop.f32.mrb[0].mxu0
        %v714 = vpop.f32.mrb[0].mxu0
        %715 = vdwg.mxu0
        %vm716 = vcmask 130048
        %v717 = vsel %vm716, %v711, -inf
        %718 = vmax.xlane.f32.xlu0 %v717
        %v719 = vpop.xlane.xlu0 %718
        %v720 = vsub.f32 %v711, %v719
        %v721 = vmul.f32 %v720, 1.442695
        %v722 = vpow.pop %v721
        %v723 = vsel %vm716, %v722, 0.0
        %724 = vadd.xlane.f32.xlu0 %v723
        %v725 = vpop.xlane.xlu0 %724
        %v726 = vrcp.pop %v725
        %v727 = vmul.f32 %v722, %v726
        %v728 = vpack.c.bf16 %v727, %v727
        %v730 = vsel %vm716, %v728, 0
        %732 = vmatprep.subr.bf16.mxu0 0
        %733 = vmatpush1.bf16.msra.mxu0 %v668
        %734 = vmatprep.subr.bf16.mxu0 0
        %735 = vmatpush1.bf16.msra.mxu0 0
        %736 = vmatprep.subr.bf16.mxu0 0
        %737 = vmatpush1.bf16.msra.mxu0 0
        %738 = vmatprep.subr.bf16.mxu0 0
        %739 = vmatpush1.bf16.msra.mxu0 0
        %740 = vmatprep.subr.bf16.mxu0 0
        %741 = vmatpush1.bf16.msra.mxu0 0
        %742 = vmatprep.subr.bf16.mxu0 0
        %743 = vmatpush1.bf16.msra.mxu0 0
        %744 = vmatprep.subr.bf16.mxu0 0
        %745 = vmatpush1.bf16.msra.mxu0 0
        %746 = vmatprep.subr.bf16.mxu0 0
        %747 = vmatpush1.bf16.msra.mxu0 0
        %748 = vmatprep.subr.bf16.mxu0 0
        %749 = vmatpush1.bf16.msra.mxu0 0
        %750 = vmatprep.subr.bf16.mxu0 0
        %751 = vmatpush1.bf16.msra.mxu0 0
        %752 = vmatprep.subr.bf16.mxu0 0
        %753 = vmatpush1.bf16.msra.mxu0 0
        %754 = vmatprep.subr.bf16.mxu0 0
        %755 = vmatpush1.bf16.msra.mxu0 0
        %756 = vmatprep.subr.bf16.mxu0 0
        %757 = vmatpush1.bf16.msra.mxu0 0
        %758 = vmatprep.subr.bf16.mxu0 0
        %759 = vmatpush1.bf16.msra.mxu0 0
        %760 = vmatprep.subr.bf16.mxu0 0
        %761 = vmatpush1.bf16.msra.mxu0 0
        %762 = vmatprep.subr.bf16.mxu0 0
        %763 = vmatpush1.bf16.msra.mxu0 0
        %764 = vmatprep.mubr.bf16.mxu0 0
        %765 = vmatmul.mubr.bf16.gmra.mrb[0].mxu0 %v730
        %v766 = vpop.f32.mrb[0].mxu0
        %v767 = vadd.f32 0.0, %v766
        %v768 = vpop.f32.mrb[0].mxu0
        %v769 = vpop.f32.mrb[0].mxu0
        %v770 = vpop.f32.mrb[0].mxu0
        %771 = vdwg.mxu0
        %v772 = vpack.c.bf16 %v767, %v767
        %v773 = vld [vmem:[#allocation10] sm:$0xf]
        %775 = vrot.lane.b32.xlu0 %v666, 120
        %v776 = vpop.permute.xlu0 %775
        %778 = vrot.lane.b32.xlu0 %v667, 120
        %v779 = vpop.permute.xlu0 %778
        %v781 = vsel %vm669, %v776, 0
        %v784 = vsel %vm669, %v779, 0
        %786 = vmatprep.subr.bf16.mxu0 0
        %787 = vmatpush1.bf16.xpose.msra.mxu0 %v784
        %788 = vmatprep.subr.bf16.mxu0 0
        %789 = vmatpush1.bf16.xpose.msra.mxu0 0
        %790 = vmatprep.subr.bf16.mxu0 0
        %791 = vmatpush1.bf16.xpose.msra.mxu0 0
        %792 = vmatprep.subr.bf16.mxu0 0
        %793 = vmatpush1.bf16.xpose.msra.mxu0 0
        %794 = vmatprep.subr.bf16.mxu0 0
        %795 = vmatpush1.bf16.xpose.msra.mxu0 0
        %796 = vmatprep.subr.bf16.mxu0 0
        %797 = vmatpush1.bf16.xpose.msra.mxu0 0
        %798 = vmatprep.subr.bf16.mxu0 0
        %799 = vmatpush1.bf16.xpose.msra.mxu0 0
        %800 = vmatprep.subr.bf16.mxu0 0
        %801 = vmatpush1.bf16.xpose.msra.mxu0 0
        %802 = vmatprep.subr.bf16.mxu0 0
        %803 = vmatpush1.bf16.xpose.msra.mxu0 0
        %804 = vmatprep.subr.bf16.mxu0 0
        %805 = vmatpush1.bf16.xpose.msra.mxu0 0
        %806 = vmatprep.subr.bf16.mxu0 0
        %807 = vmatpush1.bf16.xpose.msra.mxu0 0
        %808 = vmatprep.subr.bf16.mxu0 0
        %809 = vmatpush1.bf16.xpose.msra.mxu0 0
        %810 = vmatprep.subr.bf16.mxu0 0
        %811 = vmatpush1.bf16.xpose.msra.mxu0 0
        %812 = vmatprep.subr.bf16.mxu0 0
        %813 = vmatpush1.bf16.xpose.msra.mxu0 0
        %814 = vmatprep.subr.bf16.mxu0 0
        %815 = vmatpush1.bf16.xpose.msra.mxu0 0
        %816 = vmatprep.subr.bf16.mxu0 0
        %817 = vmatpush1.bf16.xpose.msra.mxu0 0
        %818 = vmatprep.mubr.bf16.mxu0 0
        %819 = vmatmul.mubr.bf16.gmra.mrb[0].mxu0 %v781
        %v820 = vpop.f32.mrb[0].mxu0
        %v821 = vadd.f32 0.0, %v820
        %v822 = vpop.f32.mrb[0].mxu0
        %v823 = vpop.f32.mrb[0].mxu0
        %v824 = vpop.f32.mrb[0].mxu0
        %825 = vdwg.mxu0
        %v826 = vsel %vm716, %v821, -inf
        %827 = vmax.xlane.f32.xlu0 %v826
        %v828 = vpop.xlane.xlu0 %827
        %v829 = vsub.f32 %v821, %v828
        %v830 = vmul.f32 %v829, 1.442695
        %v831 = vpow.pop %v830
        %v832 = vsel %vm716, %v831, 0.0
        %833 = vadd.xlane.f32.xlu0 %v832
        %v834 = vpop.xlane.xlu0 %833
        %v835 = vrcp.pop %v834
        %v836 = vmul.f32 %v831, %v835
        %v837 = vpack.c.bf16 %v836, %v836
        %839 = vrot.lane.b32.xlu0 %v668, 120
        %v840 = vpop.permute.xlu0 %839
        %v843 = vsel %vm716, %v837, 0
        %845 = vmatprep.subr.bf16.mxu0 0
        %846 = vmatpush1.bf16.msra.mxu0 %v840
        %847 = vmatprep.subr.bf16.mxu0 0
        %848 = vmatpush1.bf16.msra.mxu0 0
        %849 = vmatprep.subr.bf16.mxu0 0
        %850 = vmatpush1.bf16.msra.mxu0 0
        %851 = vmatprep.subr.bf16.mxu0 0
        %852 = vmatpush1.bf16.msra.mxu0 0
        %853 = vmatprep.subr.bf16.mxu0 0
        %854 = vmatpush1.bf16.msra.mxu0 0
        %855 = vmatprep.subr.bf16.mxu0 0
        %856 = vmatpush1.bf16.msra.mxu0 0
        %857 = vmatprep.subr.bf16.mxu0 0
        %858 = vmatpush1.bf16.msra.mxu0 0
        %859 = vmatprep.subr.bf16.mxu0 0
        %860 = vmatpush1.bf16.msra.mxu0 0
        %861 = vmatprep.subr.bf16.mxu0 0
        %862 = vmatpush1.bf16.msra.mxu0 0
        %863 = vmatprep.subr.bf16.mxu0 0
        %864 = vmatpush1.bf16.msra.mxu0 0
        %865 = vmatprep.subr.bf16.mxu0 0
        %866 = vmatpush1.bf16.msra.mxu0 0
        %867 = vmatprep.subr.bf16.mxu0 0
        %868 = vmatpush1.bf16.msra.mxu0 0
        %869 = vmatprep.subr.bf16.mxu0 0
        %870 = vmatpush1.bf16.msra.mxu0 0
        %871 = vmatprep.subr.bf16.mxu0 0
        %872 = vmatpush1.bf16.msra.mxu0 0
        %873 = vmatprep.subr.bf16.mxu0 0
        %874 = vmatpush1.bf16.msra.mxu0 0
        %875 = vmatprep.subr.bf16.mxu0 0
        %876 = vmatpush1.bf16.msra.mxu0 0
        %877 = vmatprep.mubr.bf16.mxu0 0
        %878 = vmatmul.mubr.bf16.gmra.mrb[0].mxu0 %v843
        %v879 = vpop.f32.mrb[0].mxu0
        %v880 = vadd.f32 0.0, %v879
        %v881 = vpop.f32.mrb[0].mxu0
        %v882 = vpop.f32.mrb[0].mxu0
        %v883 = vpop.f32.mrb[0].mxu0
        %884 = vdwg.mxu0
        %v885 = vpack.c.bf16 %v880, %v880
        %v886 = vld [vmem:[#allocation10 + $0x4] sm:$0xf]
        %v888 = vsel %vm669, %v885, 0
        %vm890 = vcmask 1043456
        %v892 = vsel %vm890, %v886, 0
        %894 = vmatprep.subr.bf16.mxu0 0
        %895 = vmatpush1.bf16.msra.mxu0 %v892
        %896 = vmatprep.subr.bf16.mxu0 0
        %897 = vmatpush1.bf16.msra.mxu0 0
        %898 = vmatprep.subr.bf16.mxu0 0
        %899 = vmatpush1.bf16.msra.mxu0 0
        %900 = vmatprep.subr.bf16.mxu0 0
        %901 = vmatpush1.bf16.msra.mxu0 0
        %902 = vmatprep.subr.bf16.mxu0 0
        %903 = vmatpush1.bf16.msra.mxu0 0
        %904 = vmatprep.subr.bf16.mxu0 0
        %905 = vmatpush1.bf16.msra.mxu0 0
        %906 = vmatprep.subr.bf16.mxu0 0
        %907 = vmatpush1.bf16.msra.mxu0 0
        %908 = vmatprep.subr.bf16.mxu0 0
        %909 = vmatpush1.bf16.msra.mxu0 0
        %910 = vmatprep.subr.bf16.mxu0 0
        %911 = vmatpush1.bf16.msra.mxu0 0
        %912 = vmatprep.subr.bf16.mxu0 0
        %913 = vmatpush1.bf16.msra.mxu0 0
        %914 = vmatprep.subr.bf16.mxu0 0
        %915 = vmatpush1.bf16.msra.mxu0 0
        %916 = vmatprep.subr.bf16.mxu0 0
        %917 = vmatpush1.bf16.msra.mxu0 0
        %918 = vmatprep.subr.bf16.mxu0 0
        %919 = vmatpush1.bf16.msra.mxu0 0
        %920 = vmatprep.subr.bf16.mxu0 0
        %921 = vmatpush1.bf16.msra.mxu0 0
        %922 = vmatprep.subr.bf16.mxu0 0
        %923 = vmatpush1.bf16.msra.mxu0 0
        %924 = vmatprep.subr.bf16.mxu0 0
        %925 = vmatpush1.bf16.msra.mxu0 0
        %926 = vmatprep.mubr.bf16.mxu0 0
        %927 = vmatmul.mubr.bf16.gmra.mrb[0].mxu0 %v888
        %v928 = vpop.f32.mrb[0].mxu0
        %v929 = vadd.f32 0.0, %v928
        %v930 = vpop.f32.mrb[0].mxu0
        %v931 = vpop.f32.mrb[0].mxu0
        %v932 = vpop.f32.mrb[0].mxu0
        %933 = vdwg.mxu0
        %v935 = vsel %vm669, %v772, 0
        %v938 = vsel %vm890, %v773, 0
        %940 = vmatprep.subr.bf16.mxu0 0
        %941 = vmatpush1.bf16.msra.mxu0 %v938
        %942 = vmatprep.subr.bf16.mxu0 0
        %943 = vmatpush1.bf16.msra.mxu0 0
        %944 = vmatprep.subr.bf16.mxu0 0
        %945 = vmatpush1.bf16.msra.mxu0 0
        %946 = vmatprep.subr.bf16.mxu0 0
        %947 = vmatpush1.bf16.msra.mxu0 0
        %948 = vmatprep.subr.bf16.mxu0 0
        %949 = vmatpush1.bf16.msra.mxu0 0
        %950 = vmatprep.subr.bf16.mxu0 0
        %951 = vmatpush1.bf16.msra.mxu0 0
        %952 = vmatprep.subr.bf16.mxu0 0
        %953 = vmatpush1.bf16.msra.mxu0 0
        %954 = vmatprep.subr.bf16.mxu0 0
        %955 = vmatpush1.bf16.msra.mxu0 0
        %956 = vmatprep.subr.bf16.mxu0 0
        %957 = vmatpush1.bf16.msra.mxu0 0
        %958 = vmatprep.subr.bf16.mxu0 0
        %959 = vmatpush1.bf16.msra.mxu0 0
        %960 = vmatprep.subr.bf16.mxu0 0
        %961 = vmatpush1.bf16.msra.mxu0 0
        %962 = vmatprep.subr.bf16.mxu0 0
        %963 = vmatpush1.bf16.msra.mxu0 0
        %964 = vmatprep.subr.bf16.mxu0 0
        %965 = vmatpush1.bf16.msra.mxu0 0
        %966 = vmatprep.subr.bf16.mxu0 0
        %967 = vmatpush1.bf16.msra.mxu0 0
        %968 = vmatprep.subr.bf16.mxu0 0
        %969 = vmatpush1.bf16.msra.mxu0 0
        %970 = vmatprep.subr.bf16.mxu0 0
        %971 = vmatpush1.bf16.msra.mxu0 0
        %972 = vmatprep.mubr.bf16.mxu0 0
        %973 = vmatmul.mubr.bf16.gmra.mrb[0].mxu0 %v935
        %v974 = vpop.f32.mrb[0].mxu0
        %v975 = vadd.f32 %v929, %v974
        %v976 = vpop.f32.mrb[0].mxu0
        %v977 = vpop.f32.mrb[0].mxu0
        %v978 = vpop.f32.mrb[0].mxu0
        %979 = vdwg.mxu0
        %980 = vrot.lane.b32.xlu0 %v666, 112
        %v981 = vpop.permute.xlu0 %980
        %982 = vrot.lane.b32.xlu0 %v667, 112
        %v983 = vpop.permute.xlu0 %982
        %v985 = vsel %vm669, %v981, 0
        %v988 = vsel %vm669, %v983, 0
        %990 = vmatprep.subr.bf16.mxu0 0
        %991 = vmatpush1.bf16.xpose.msra.mxu0 %v988
        %992 = vmatprep.subr.bf16.mxu0 0
        %993 = vmatpush1.bf16.xpose.msra.mxu0 0
        %994 = vmatprep.subr.bf16.mxu0 0
        %995 = vmatpush1.bf16.xpose.msra.mxu0 0
        %996 = vmatprep.subr.bf16.mxu0 0
        %997 = vmatpush1.bf16.xpose.msra.mxu0 0
        %998 = vmatprep.subr.bf16.mxu0 0
        %999 = vmatpush1.bf16.xpose.msra.mxu0 0
        %1000 = vmatprep.subr.bf16.mxu0 0
        %1001 = vmatpush1.bf16.xpose.msra.mxu0 0
        %1002 = vmatprep.subr.bf16.mxu0 0
        %1003 = vmatpush1.bf16.xpose.msra.mxu0 0
        %1004 = vmatprep.subr.bf16.mxu0 0
        %1005 = vmatpush1.bf16.xpose.msra.mxu0 0
        %1006 = vmatprep.subr.bf16.mxu0 0
        %1007 = vmatpush1.bf16.xpose.msra.mxu0 0
        %1008 = vmatprep.subr.bf16.mxu0 0
        %1009 = vmatpush1.bf16.xpose.msra.mxu0 0
        %1010 = vmatprep.subr.bf16.mxu0 0
        %1011 = vmatpush1.bf16.xpose.msra.mxu0 0
        %1012 = vmatprep.subr.bf16.mxu0 0
        %1013 = vmatpush1.bf16.xpose.msra.mxu0 0
        %1014 = vmatprep.subr.bf16.mxu0 0
        %1015 = vmatpush1.bf16.xpose.msra.mxu0 0
        %1016 = vmatprep.subr.bf16.mxu0 0
        %1017 = vmatpush1.bf16.xpose.msra.mxu0 0
        %1018 = vmatprep.subr.bf16.mxu0 0
        %1019 = vmatpush1.bf16.xpose.msra.mxu0 0
        %1020 = vmatprep.subr.bf16.mxu0 0
        %1021 = vmatpush1.bf16.xpose.msra.mxu0 0
        %1022 = vmatprep.mubr.bf16.mxu0 0
        %1023 = vmatmul.mubr.bf16.gmra.mrb[0].mxu0 %v985
        %v1024 = vpop.f32.mrb[0].mxu0
        %v1025 = vadd.f32 0.0, %v1024
        %v1026 = vpop.f32.mrb[0].mxu0
        %v1027 = vpop.f32.mrb[0].mxu0
        %v1028 = vpop.f32.mrb[0].mxu0
        %1029 = vdwg.mxu0
        %v1030 = vsel %vm716, %v1025, -inf
        %1031 = vmax.xlane.f32.xlu0 %v1030
        %v1032 = vpop.xlane.xlu0 %1031
        %v1033 = vsub.f32 %v1025, %v1032
        %v1034 = vmul.f32 %v1033, 1.442695
        %v1035 = vpow.pop %v1034
        %v1036 = vsel %vm716, %v1035, 0.0
        %1037 = vadd.xlane.f32.xlu0 %v1036
        %v1038 = vpop.xlane.xlu0 %1037
        %v1039 = vrcp.pop %v1038
        %v1040 = vmul.f32 %v1035, %v1039
        %v1041 = vpack.c.bf16 %v1040, %v1040
        %1042 = vrot.lane.b32.xlu0 %v668, 112
        %v1043 = vpop.permute.xlu0 %1042
        %v1046 = vsel %vm716, %v1041, 0
        %1048 = vmatprep.subr.bf16.mxu0 0
        %1049 = vmatpush1.bf16.msra.mxu0 %v1043
        %1050 = vmatprep.subr.bf16.mxu0 0
        %1051 = vmatpush1.bf16.msra.mxu0 0
        %1052 = vmatprep.subr.bf16.mxu0 0
        %1053 = vmatpush1.bf16.msra.mxu0 0
        %1054 = vmatprep.subr.bf16.mxu0 0
        %1055 = vmatpush1.bf16.msra.mxu0 0
        %1056 = vmatprep.subr.bf16.mxu0 0
        %1057 = vmatpush1.bf16.msra.mxu0 0
        %1058 = vmatprep.subr.bf16.mxu0 0
        %1059 = vmatpush1.bf16.msra.mxu0 0
        %1060 = vmatprep.subr.bf16.mxu0 0
        %1061 = vmatpush1.bf16.msra.mxu0 0
        %1062 = vmatprep.subr.bf16.mxu0 0
        %1063 = vmatpush1.bf16.msra.mxu0 0
        %1064 = vmatprep.subr.bf16.mxu0 0
        %1065 = vmatpush1.bf16.msra.mxu0 0
        %1066 = vmatprep.subr.bf16.mxu0 0
        %1067 = vmatpush1.bf16.msra.mxu0 0
        %1068 = vmatprep.subr.bf16.mxu0 0
        %1069 = vmatpush1.bf16.msra.mxu0 0
        %1070 = vmatprep.subr.bf16.mxu0 0
        %1071 = vmatpush1.bf16.msra.mxu0 0
        %1072 = vmatprep.subr.bf16.mxu0 0
        %1073 = vmatpush1.bf16.msra.mxu0 0
        %1074 = vmatprep.subr.bf16.mxu0 0
        %1075 = vmatpush1.bf16.msra.mxu0 0
        %1076 = vmatprep.subr.bf16.mxu0 0
        %1077 = vmatpush1.bf16.msra.mxu0 0
        %1078 = vmatprep.subr.bf16.mxu0 0
        %1079 = vmatpush1.bf16.msra.mxu0 0
        %1080 = vmatprep.mubr.bf16.mxu0 0
        %1081 = vmatmul.mubr.bf16.gmra.mrb[0].mxu0 %v1046
        %v1082 = vpop.f32.mrb[0].mxu0
        %v1083 = vadd.f32 0.0, %v1082
        %v1084 = vpop.f32.mrb[0].mxu0
        %v1085 = vpop.f32.mrb[0].mxu0
        %v1086 = vpop.f32.mrb[0].mxu0
        %1087 = vdwg.mxu0
        %v1088 = vpack.c.bf16 %v1083, %v1083
        %v1089 = vld [vmem:[#allocation10 + $0x8] sm:$0xf]
        %v1091 = vsel %vm669, %v1088, 0
        %v1094 = vsel %vm890, %v1089, 0
        %1096 = vmatprep.subr.bf16.mxu0 0
        %1097 = vmatpush1.bf16.msra.mxu0 %v1094
        %1098 = vmatprep.subr.bf16.mxu0 0
        %1099 = vmatpush1.bf16.msra.mxu0 0
        %1100 = vmatprep.subr.bf16.mxu0 0
        %1101 = vmatpush1.bf16.msra.mxu0 0
        %1102 = vmatprep.subr.bf16.mxu0 0
        %1103 = vmatpush1.bf16.msra.mxu0 0
        %1104 = vmatprep.subr.bf16.mxu0 0
        %1105 = vmatpush1.bf16.msra.mxu0 0
        %1106 = vmatprep.subr.bf16.mxu0 0
        %1107 = vmatpush1.bf16.msra.mxu0 0
        %1108 = vmatprep.subr.bf16.mxu0 0
        %1109 = vmatpush1.bf16.msra.mxu0 0
        %1110 = vmatprep.subr.bf16.mxu0 0
        %1111 = vmatpush1.bf16.msra.mxu0 0
        %1112 = vmatprep.subr.bf16.mxu0 0
        %1113 = vmatpush1.bf16.msra.mxu0 0
        %1114 = vmatprep.subr.bf16.mxu0 0
        %1115 = vmatpush1.bf16.msra.mxu0 0
        %1116 = vmatprep.subr.bf16.mxu0 0
        %1117 = vmatpush1.bf16.msra.mxu0 0
        %1118 = vmatprep.subr.bf16.mxu0 0
        %1119 = vmatpush1.bf16.msra.mxu0 0
        %1120 = vmatprep.subr.bf16.mxu0 0
        %1121 = vmatpush1.bf16.msra.mxu0 0
        %1122 = vmatprep.subr.bf16.mxu0 0
        %1123 = vmatpush1.bf16.msra.mxu0 0
        %1124 = vmatprep.subr.bf16.mxu0 0
        %1125 = vmatpush1.bf16.msra.mxu0 0
        %1126 = vmatprep.subr.bf16.mxu0 0
        %1127 = vmatpush1.bf16.msra.mxu0 0
        %1128 = vmatprep.mubr.bf16.mxu0 0
        %1129 = vmatmul.mubr.bf16.gmra.mrb[0].mxu0 %v1091
        %v1130 = vpop.f32.mrb[0].mxu0
        %v1131 = vadd.f32 0.0, %v1130
        %v1132 = vpop.f32.mrb[0].mxu0
        %v1133 = vpop.f32.mrb[0].mxu0
        %v1134 = vpop.f32.mrb[0].mxu0
        %1135 = vdwg.mxu0
        %v1136 = vadd.f32 %v975, %v1131
        %1137 = vrot.lane.b32.xlu0 %v666, 104
        %v1138 = vpop.permute.xlu0 %1137
        %1139 = vrot.lane.b32.xlu0 %v667, 104
        %v1140 = vpop.permute.xlu0 %1139
        %v1142 = vsel %vm669, %v1138, 0
        %v1145 = vsel %vm669, %v1140, 0
        %1147 = vmatprep.subr.bf16.mxu0 0
        %1148 = vmatpush1.bf16.xpose.msra.mxu0 %v1145
        %1149 = vmatprep.subr.bf16.mxu0 0
        %1150 = vmatpush1.bf16.xpose.msra.mxu0 0
        %1151 = vmatprep.subr.bf16.mxu0 0
        %1152 = vmatpush1.bf16.xpose.msra.mxu0 0
        %1153 = vmatprep.subr.bf16.mxu0 0
        %1154 = vmatpush1.bf16.xpose.msra.mxu0 0
        %1155 = vmatprep.subr.bf16.mxu0 0
        %1156 = vmatpush1.bf16.xpose.msra.mxu0 0
        %1157 = vmatprep.subr.bf16.mxu0 0
        %1158 = vmatpush1.bf16.xpose.msra.mxu0 0
        %1159 = vmatprep.subr.bf16.mxu0 0
        %1160 = vmatpush1.bf16.xpose.msra.mxu0 0
        %1161 = vmatprep.subr.bf16.mxu0 0
        %1162 = vmatpush1.bf16.xpose.msra.mxu0 0
        %1163 = vmatprep.subr.bf16.mxu0 0
        %1164 = vmatpush1.bf16.xpose.msra.mxu0 0
        %1165 = vmatprep.subr.bf16.mxu0 0
        %1166 = vmatpush1.bf16.xpose.msra.mxu0 0
        %1167 = vmatprep.subr.bf16.mxu0 0
        %1168 = vmatpush1.bf16.xpose.msra.mxu0 0
        %1169 = vmatprep.subr.bf16.mxu0 0
        %1170 = vmatpush1.bf16.xpose.msra.mxu0 0
        %1171 = vmatprep.subr.bf16.mxu0 0
        %1172 = vmatpush1.bf16.xpose.msra.mxu0 0
        %1173 = vmatprep.subr.bf16.mxu0 0
        %1174 = vmatpush1.bf16.xpose.msra.mxu0 0
        %1175 = vmatprep.subr.bf16.mxu0 0
        %1176 = vmatpush1.bf16.xpose.msra.mxu0 0
        %1177 = vmatprep.subr.bf16.mxu0 0
        %1178 = vmatpush1.bf16.xpose.msra.mxu0 0
        %1179 = vmatprep.mubr.bf16.mxu0 0
        %1180 = vmatmul.mubr.bf16.gmra.mrb[0].mxu0 %v1142
        %v1181 = vpop.f32.mrb[0].mxu0
        %v1182 = vadd.f32 0.0, %v1181
        %v1183 = vpop.f32.mrb[0].mxu0
        %v1184 = vpop.f32.mrb[0].mxu0
        %v1185 = vpop.f32.mrb[0].mxu0
        %1186 = vdwg.mxu0
        %v1187 = vsel %vm716, %v1182, -inf
        %1188 = vmax.xlane.f32.xlu0 %v1187
        %v1189 = vpop.xlane.xlu0 %1188
        %v1190 = vsub.f32 %v1182, %v1189
        %v1191 = vmul.f32 %v1190, 1.442695
        %v1192 = vpow.pop %v1191
        %v1193 = vsel %vm716, %v1192, 0.0
        %1194 = vadd.xlane.f32.xlu0 %v1193
        %v1195 = vpop.xlane.xlu0 %1194
        %v1196 = vrcp.pop %v1195
        %v1197 = vmul.f32 %v1192, %v1196
        %v1198 = vpack.c.bf16 %v1197, %v1197
        %1199 = vrot.lane.b32.xlu0 %v668, 104
        %v1200 = vpop.permute.xlu0 %1199
        %v1203 = vsel %vm716, %v1198, 0
        %1205 = vmatprep.subr.bf16.mxu0 0
        %1206 = vmatpush1.bf16.msra.mxu0 %v1200
        %1207 = vmatprep.subr.bf16.mxu0 0
        %1208 = vmatpush1.bf16.msra.mxu0 0
        %1209 = vmatprep.subr.bf16.mxu0 0
        %1210 = vmatpush1.bf16.msra.mxu0 0
        %1211 = vmatprep.subr.bf16.mxu0 0
        %1212 = vmatpush1.bf16.msra.mxu0 0
        %1213 = vmatprep.subr.bf16.mxu0 0
        %1214 = vmatpush1.bf16.msra.mxu0 0
        %1215 = vmatprep.subr.bf16.mxu0 0
        %1216 = vmatpush1.bf16.msra.mxu0 0
        %1217 = vmatprep.subr.bf16.mxu0 0
        %1218 = vmatpush1.bf16.msra.mxu0 0
        %1219 = vmatprep.subr.bf16.mxu0 0
        %1220 = vmatpush1.bf16.msra.mxu0 0
        %1221 = vmatprep.subr.bf16.mxu0 0
        %1222 = vmatpush1.bf16.msra.mxu0 0
        %1223 = vmatprep.subr.bf16.mxu0 0
        %1224 = vmatpush1.bf16.msra.mxu0 0
        %1225 = vmatprep.subr.bf16.mxu0 0
        %1226 = vmatpush1.bf16.msra.mxu0 0
        %1227 = vmatprep.subr.bf16.mxu0 0
        %1228 = vmatpush1.bf16.msra.mxu0 0
        %1229 = vmatprep.subr.bf16.mxu0 0
        %1230 = vmatpush1.bf16.msra.mxu0 0
        %1231 = vmatprep.subr.bf16.mxu0 0
        %1232 = vmatpush1.bf16.msra.mxu0 0
        %1233 = vmatprep.subr.bf16.mxu0 0
        %1234 = vmatpush1.bf16.msra.mxu0 0
        %1235 = vmatprep.subr.bf16.mxu0 0
        %1236 = vmatpush1.bf16.msra.mxu0 0
        %1237 = vmatprep.mubr.bf16.mxu0 0
        %1238 = vmatmul.mubr.bf16.gmra.mrb[0].mxu0 %v1203
        %v1239 = vpop.f32.mrb[0].mxu0
        %v1240 = vadd.f32 0.0, %v1239
        %v1241 = vpop.f32.mrb[0].mxu0
        %v1242 = vpop.f32.mrb[0].mxu0
        %v1243 = vpop.f32.mrb[0].mxu0
        %1244 = vdwg.mxu0
        %v1245 = vpack.c.bf16 %v1240, %v1240
        %v1246 = vld [vmem:[#allocation10 + $0xc] sm:$0xf]
        %v1248 = vsel %vm669, %v1245, 0
        %v1251 = vsel %vm890, %v1246, 0
        %1253 = vmatprep.subr.bf16.mxu0 0
        %1254 = vmatpush1.bf16.msra.mxu0 %v1251
        %1255 = vmatprep.subr.bf16.mxu0 0
        %1256 = vmatpush1.bf16.msra.mxu0 0
        %1257 = vmatprep.subr.bf16.mxu0 0
        %1258 = vmatpush1.bf16.msra.mxu0 0
        %1259 = vmatprep.subr.bf16.mxu0 0
        %1260 = vmatpush1.bf16.msra.mxu0 0
        %1261 = vmatprep.subr.bf16.mxu0 0
        %1262 = vmatpush1.bf16.msra.mxu0 0
        %1263 = vmatprep.subr.bf16.mxu0 0
        %1264 = vmatpush1.bf16.msra.mxu0 0
        %1265 = vmatprep.subr.bf16.mxu0 0
        %1266 = vmatpush1.bf16.msra.mxu0 0
        %1267 = vmatprep.subr.bf16.mxu0 0
        %1268 = vmatpush1.bf16.msra.mxu0 0
        %1269 = vmatprep.subr.bf16.mxu0 0
        %1270 = vmatpush1.bf16.msra.mxu0 0
        %1271 = vmatprep.subr.bf16.mxu0 0
        %1272 = vmatpush1.bf16.msra.mxu0 0
        %1273 = vmatprep.subr.bf16.mxu0 0
        %1274 = vmatpush1.bf16.msra.mxu0 0
        %1275 = vmatprep.subr.bf16.mxu0 0
        %1276 = vmatpush1.bf16.msra.mxu0 0
        %1277 = vmatprep.subr.bf16.mxu0 0
        %1278 = vmatpush1.bf16.msra.mxu0 0
        %1279 = vmatprep.subr.bf16.mxu0 0
        %1280 = vmatpush1.bf16.msra.mxu0 0
        %1281 = vmatprep.subr.bf16.mxu0 0
        %1282 = vmatpush1.bf16.msra.mxu0 0
        %1283 = vmatprep.subr.bf16.mxu0 0
        %1284 = vmatpush1.bf16.msra.mxu0 0
        %1285 = vmatprep.mubr.bf16.mxu0 0
        %1286 = vmatmul.mubr.bf16.gmra.mrb[0].mxu0 %v1248
        %v1287 = vpop.f32.mrb[0].mxu0
        %v1288 = vadd.f32 0.0, %v1287
        %v1289 = vpop.f32.mrb[0].mxu0
        %v1290 = vpop.f32.mrb[0].mxu0
        %v1291 = vpop.f32.mrb[0].mxu0
        %1292 = vdwg.mxu0
        %v1293 = vadd.f32 %v1136, %v1288
        %v1294 = vld [vmem:[%s9] sm:$0x1]
        %v1296 = vlaneseq
        %v1297 = vshrl.u32 %v1296, 7
        %v1298 = vsub.s32 0, %v1297
        %v1299 = vrot.slane %v1294, %v1298
        %v1301 = vadd.f32 %v1293, %v1299
        %1302 = vst [vmem:[%s457] sm:$0xff] %v1301
        %s1303 = sand.u32 %s259, 1
        %s1304 = scalar_lea.sflag [#allocation4], %s1303
        %s1305 = sand.u32 %s259, 1
        %s1306 = smul.addr %s1305, 8
        %s1307 = scalar_lea.vmem [#allocation11], %s1306
        // Predicated region
        $region81: #{tpu_custom_call.1} parent=59 // pred_check
          %p1308 = pneg %p269
        $region82: #{tpu_custom_call.1} parent=59 // pred_check_branch
          %1310 = sbr.rel (%p1308) target = $region84
        $region83: #{tpu_custom_call.1} parent=59 // pred_region
          %s1312 = ssub.s32 128, 128
          %1313 = vsyncadd %s1304, %s1312
          %s1314 = smul.addr %s31, 128
          %s1315 = scalar_lea.hbm %s10, %s1314
          %s1317 = sshll.u32 %s1307, 4
          %s1318 = int_to_ptr.vmem [resolvable:$true] %s1317
          %1320 = dma.vmem_to_hbm [thread:$0]  %s1318, 128, %s1315, %s1304
        $region84: #{tpu_custom_call.1} parent=59 // pred_fallthru
          _
      $region60: #{tpu_custom_call.1} parent=5 // pred_fallthru
        _
      %p1321 = scmp.le.s32.totalorder 2, %s26
      // Predicated region
      $region85: #{tpu_custom_call.1} parent=5 // pred_check
        %p1322 = pneg %p1321
      $region86: #{tpu_custom_call.1} parent=5 // pred_check_branch
        %1324 = sbr.rel (%p1322) target = $region88
      $region87: #{tpu_custom_call.1} parent=5 // pred_region
        %s1325 = ssub.s32 %s26, 2
        // Predicated region
        $region89: #{tpu_custom_call.1} parent=87 // pred_check
          %p1326 = pneg %p275
        $region90: #{tpu_custom_call.1} parent=87 // pred_check_branch
          %1328 = sbr.rel (%p1326) target = $region92
        $region91: #{tpu_custom_call.1} parent=87 // pred_region
          %s1329 = sand.u32 %s260, 1
          %s1330 = scalar_lea.sflag [#allocation4], %s1329
          %s1331 = sand.u32 %s260, 1
          %s1332 = smul.addr %s1331, 8
          %s1333 = scalar_lea.vmem [#allocation11], %s1332
          %1334 = dma.done %s1330, 128
        $region92: #{tpu_custom_call.1} parent=87 // pred_fallthru
          _
      $region88: #{tpu_custom_call.1} parent=5 // pred_fallthru
        _
    $region6: #{tpu_custom_call.1} parent=1 // loop_footer
      %s30 = sadd.s32 1, %s26
    $region7: #{tpu_custom_call.1} parent=1 // loop_footer_branch
      %25 = sbr.rel target = $region3
    $region8: #{tpu_custom_call.1} parent=1 // loop_exit
      _
    %1335 = vsyncpa [#allocation3], 1
    %s1336 = scalar_lea.sflag [#allocation3], 1
    %1337 = vsyncpa %s1336, 1
    %1338 = vsyncpa [#allocation6], 1
    %s1339 = scalar_lea.sflag [#allocation6], 1
    %1340 = vsyncpa %s1339, 1
    %1341 = vsyncpa [#allocation9], 1
    %1342 = vsyncpa [#allocation4], 1
    %s1343 = scalar_lea.sflag [#allocation4], 1
    %1344 = vsyncpa %s1343, 1

</llo_original>
